<compile_context>
chip_gen: v6e
topology: v6e:2x2x1
jax: 0.10.0
libtpu: 0.0.40
codegen_flags: <defaults>
</compile_context>

<pallas_src>
import functools
import math

import jax
import jax.numpy as jnp
from jax.experimental import pallas as pl
from jax.experimental.pallas import tpu as pltpu


def lstm_actor_kernel(x_ref, wih_ref, whh_ref, b_ref, w1_ref, b1_ref,
                      waf_ref, baf_ref, out_ref, *, seq_len, n_actors,
                      action_dim):
    TB, _ = x_ref.shape
    T = seq_len
    B = TB // T
    H = whh_ref.shape[0]
    A = action_dim

    whh = whh_ref[...]                                            # [H, 4H], resident

    # --- hoisted input projection (bias folded in), one MXU matmul ----------
    # g-gate columns of wih/b are pre-scaled x2 => sigmoid trick below is exact.
    xwb = jnp.dot(x_ref[...], wih_ref[...],
                  preferred_element_type=jnp.float32) + b_ref[...]   # [T*B, 4H]

    h = jnp.zeros((B, H), jnp.float32)
    c = jnp.zeros((B, H), jnp.float32)

    # T is static & tiny -> fully unrolled loop with static sublane slices.
    for t in range(T):
        gates = xwb[t * B:(t + 1) * B, :] + jnp.dot(
            h, whh, preferred_element_type=jnp.float32)              # [B, 4H]
        act = jax.nn.sigmoid(gates)          # ONE full-width EUP transcendental
        i_g = act[:, 0:H]
        f_g = act[:, H:2 * H]
        g_g = 2.0 * act[:, 2 * H:3 * H] - 1.0   # == tanh(pre_g) (cols pre-scaled)
        o_g = act[:, 3 * H:4 * H]
        c = f_g * c + i_g * g_g
        h = o_g * jnp.tanh(c)

    # linear_layer: Linear(H, 128) + ReLU   (lstm_out[:, -1, :] == h)
    feat = jnp.maximum(
        jnp.dot(h, w1_ref[...], preferred_element_type=jnp.float32) + b1_ref[...],
        0.0)                                                         # [B, 128]

    # Fused actor heads: one matmul for all heads, per-head softmax stored
    # directly into static lane slices of the output (no concatenate).
    logits = (jnp.dot(feat, waf_ref[...], preferred_element_type=jnp.float32)
              + baf_ref[...])                                        # [B, n_actors*A]
    for a in range(n_actors):
        lg = logits[:, a * A:(a + 1) * A]                            # [B, A]
        m = jnp.max(lg, axis=-1, keepdims=True)
        e = jnp.exp(lg - m)
        out_ref[:, a * A:(a + 1) * A] = e / jnp.sum(e, axis=-1, keepdims=True)


def prepare_params(params):
    """One-time packing for the kernel: head stacking + g-gate pre-scaling."""
    H = params["whh"].shape[0]
    n_actors, F, A = params["wa"].shape

    def scale_g(w):  # double the g-gate columns (gate order i, f, g, o)
        return w.at[..., 2 * H:3 * H].multiply(2.0)

    return dict(
        wih=scale_g(params["wih"]),
        whh=scale_g(params["whh"]),
        b=scale_g(params["b"]),
        w1=params["w1"],
        b1=params["b1"],
        wa_flat=jnp.transpose(params["wa"], (1, 0, 2)).reshape(F, n_actors * A),
        ba_flat=params["ba"].reshape(1, n_actors * A),
        n_actors=n_actors,
        action_dim=A,
    )


def lstm_actor_forward(x_btI, kp):
    """x_btI: [B, T, I] float32 (PyTorch batch_first). Returns [B, n_actors, A].

    For throughput, callers should batch so B >= 8 (ideally 128-256); the demo
    below uses B=2 only to match the spec's small shapes.
    """
    B, T, I = x_btI.shape
    n_actors, A = kp["n_actors"], kp["action_dim"]

    # Time-major flattened layout (row = t*B + b): per-step reads in the kernel
    # are contiguous sublane blocks, not middle-dim slices.
    x_tb = jnp.transpose(x_btI, (1, 0, 2)).reshape(T * B, I)

    kernel = functools.partial(lstm_actor_kernel, seq_len=T,
                               n_actors=n_actors, action_dim=A)
    vmem = pl.BlockSpec(memory_space=pltpu.MemorySpace.VMEM)
    out_flat = pl.pallas_call(
        kernel,
        out_shape=jax.ShapeDtypeStruct((B, n_actors * A), jnp.float32),
        in_specs=[vmem] * 8,
        out_specs=vmem,
    )(x_tb, kp["wih"], kp["whh"], kp["b"], kp["w1"], kp["b1"],
      kp["wa_flat"], kp["ba_flat"])
    return out_flat.reshape(B, n_actors, A)


def init_params(key, input_size, hidden_size, n_actors, action_dim):
    """Deterministic PyTorch-style uniform(-1/sqrt(fan), 1/sqrt(fan)) init."""
    ks = jax.random.split(key, 10)
    kH = 1.0 / math.sqrt(hidden_size)
    k128 = 1.0 / math.sqrt(128)

    def u(k, shape, bound):
        return jax.random.uniform(k, shape, jnp.float32, -bound, bound)

    wih = u(ks[0], (input_size, 4 * hidden_size), kH)
    whh = u(ks[1], (hidden_size, 4 * hidden_size), kH)
    b_ih = u(ks[2], (1, 4 * hidden_size), kH)
    b_hh = u(ks[3], (1, 4 * hidden_size), kH)
    w1 = u(ks[4], (hidden_size, 128), kH)
    b1 = u(ks[5], (1, 128), kH)
    wa = u(ks[6], (n_actors, 128, action_dim), k128)
    ba = u(ks[7], (n_actors, 1, action_dim), k128)
    return dict(wih=wih, whh=whh, b=b_ih + b_hh, w1=w1, b1=b1, wa=wa, ba=ba)


def reference_forward(x, params):
    """Pure-JAX reference mirroring the PyTorch module (softmax=True)."""
    B, T, I = x.shape
    H = params["whh"].shape[0]
    h = jnp.zeros((B, H), jnp.float32)
    c = jnp.zeros((B, H), jnp.float32)
    for t in range(T):
        gates = x[:, t, :] @ params["wih"] + h @ params["whh"] + params["b"]
        i_g = jax.nn.sigmoid(gates[:, :H])
        f_g = jax.nn.sigmoid(gates[:, H:2 * H])
        g_g = jnp.tanh(gates[:, 2 * H:3 * H])
        o_g = jax.nn.sigmoid(gates[:, 3 * H:])
        c = f_g * c + i_g * g_g
        h = o_g * jnp.tanh(c)
    feat = jnp.maximum(h @ params["w1"] + params["b1"], 0.0)
    outs = []
    for a in range(params["wa"].shape[0]):
        logits = feat @ params["wa"][a] + params["ba"][a]
        outs.append(jax.nn.softmax(logits, axis=-1)[:, None, :])
    return jnp.concatenate(outs, axis=1)


if __name__ == "__main__":
    # observation_space.shape = (num_frame, max_notes, note_feature) = (8, 4, 4)
    # -> LSTM input_size = 16; small hidden_size = 32; action_space = (8, 8, 8)
    B, T = 2, 8
    max_notes, note_feature = 4, 4
    I = max_notes * note_feature
    H = 32
    action_space = (8, 8, 8)          # equal dims so torch.cat(dim=1) is well-defined
    n_actors, A = len(action_space), action_space[0]

    key = jax.random.PRNGKey(0)
    k_x, k_p = jax.random.split(key)
    x = jax.random.normal(k_x, (B, T, I), jnp.float32)
    params = init_params(k_p, I, H, n_actors, A)
    kparams = prepare_params(params)   # one-time packing / g-gate pre-scaling

    out = lstm_actor_forward(x, kparams)
    out = jax.block_until_ready(out)

    ref = reference_forward(x, params)
    assert out.shape == (B, n_actors, A)
    # Exact softmax normalization again (no approx reciprocal); small slack for
    # the tanh-via-sigmoid hardware approximation difference in the recurrence.
    assert jnp.allclose(out, ref, atol=1e-4, rtol=1e-4), "mismatch vs pure-JAX reference"
    # TODO(synk): hidden_state input is assumed None (zeros init) and is not
    # returned, matching the default call path of the PyTorch module.

    print("KERNEL_OK")
</pallas_src>

<mosaic_0001>
module attributes {stable_mosaic.version = 11 : i64} {
  func.func @lstm_actor_kernel(%arg0: memref<16x16xf32, #tpu.memory_space<vmem>>, %arg1: memref<16x128xf32, #tpu.memory_space<vmem>>, %arg2: memref<32x128xf32, #tpu.memory_space<vmem>>, %arg3: memref<1x128xf32, #tpu.memory_space<vmem>>, %arg4: memref<32x128xf32, #tpu.memory_space<vmem>>, %arg5: memref<1x128xf32, #tpu.memory_space<vmem>>, %arg6: memref<128x24xf32, #tpu.memory_space<vmem>>, %arg7: memref<1x24xf32, #tpu.memory_space<vmem>>, %arg8: memref<2x24xf32, #tpu.memory_space<vmem>>) attributes {dimension_semantics = [], scalar_prefetch = 0 : i64, scratch_operands = 0 : i64, tpu.core_type = #tpu.core_type<tc>} {
    %c0 = arith.constant 0 : index
    %c0_0 = arith.constant 0 : index
    %0 = vector.load %arg2[%c0, %c0_0] : memref<32x128xf32, #tpu.memory_space<vmem>>, vector<32x128xf32>
    %c0_1 = arith.constant 0 : index
    %c0_2 = arith.constant 0 : index
    %1 = vector.load %arg0[%c0_1, %c0_2] : memref<16x16xf32, #tpu.memory_space<vmem>>, vector<16x16xf32>
    %c0_3 = arith.constant 0 : index
    %c0_4 = arith.constant 0 : index
    %2 = vector.load %arg1[%c0_3, %c0_4] : memref<16x128xf32, #tpu.memory_space<vmem>>, vector<16x128xf32>
    %cst = arith.constant dense<0.000000e+00> : vector<16x128xf32>
    %3 = tpu.matmul %1, %2, %cst {dimension_numbers = #tpu.dot_dimension_numbers<[1], [0], [0], [1], [0, 0, 1, 1], [], []>} : vector<16x16xf32>, vector<16x128xf32>, vector<16x128xf32> -> vector<16x128xf32>
    %c0_5 = arith.constant 0 : index
    %c0_6 = arith.constant 0 : index
    %4 = vector.load %arg3[%c0_5, %c0_6] : memref<1x128xf32, #tpu.memory_space<vmem>>, vector<1x128xf32>
    %5 = vector.broadcast %4 : vector<1x128xf32> to vector<16x128xf32>
    %6 = arith.addf %3, %5 : vector<16x128xf32>
    %cst_7 = arith.constant 0.000000e+00 : f32
    %7 = vector.broadcast %cst_7 : f32 to vector<2x32xf32>
    %cst_8 = arith.constant 0.000000e+00 : f32
    %8 = vector.broadcast %cst_8 : f32 to vector<2x32xf32>
    %9 = vector.extract_strided_slice %6 {offsets = [0, 0], sizes = [2, 128], strides = [1, 1]} : vector<16x128xf32> to vector<2x128xf32>
    %cst_9 = arith.constant dense<0.000000e+00> : vector<2x128xf32>
    %10 = tpu.matmul %7, %0, %cst_9 {dimension_numbers = #tpu.dot_dimension_numbers<[1], [0], [0], [1], [0, 0, 1, 1], [], []>} : vector<2x32xf32>, vector<32x128xf32>, vector<2x128xf32> -> vector<2x128xf32>
    %11 = arith.addf %9, %10 : vector<2x128xf32>
    %12 = arith.negf %11 : vector<2x128xf32>
    %13 = math.exp %12 : vector<2x128xf32>
    %cst_10 = arith.constant 1.000000e+00 : f32
    %14 = vector.broadcast %cst_10 : f32 to vector<2x128xf32>
    %15 = arith.addf %14, %13 : vector<2x128xf32>
    %16 = arith.divf %14, %15 : vector<2x128xf32>
    %17 = vector.extract_strided_slice %16 {offsets = [0, 0], sizes = [2, 32], strides = [1, 1]} : vector<2x128xf32> to vector<2x32xf32>
    %18 = vector.extract_strided_slice %16 {offsets = [0, 32], sizes = [2, 32], strides = [1, 1]} : vector<2x128xf32> to vector<2x32xf32>
    %19 = vector.extract_strided_slice %16 {offsets = [0, 64], sizes = [2, 32], strides = [1, 1]} : vector<2x128xf32> to vector<2x32xf32>
    %cst_11 = arith.constant 2.000000e+00 : f32
    %20 = vector.broadcast %cst_11 : f32 to vector<2x32xf32>
    %21 = arith.mulf %20, %19 : vector<2x32xf32>
    %cst_12 = arith.constant 1.000000e+00 : f32
    %22 = vector.broadcast %cst_12 : f32 to vector<2x32xf32>
    %23 = arith.subf %21, %22 : vector<2x32xf32>
    %24 = vector.extract_strided_slice %16 {offsets = [0, 96], sizes = [2, 32], strides = [1, 1]} : vector<2x128xf32> to vector<2x32xf32>
    %25 = arith.mulf %18, %8 : vector<2x32xf32>
    %26 = arith.mulf %17, %23 : vector<2x32xf32>
    %27 = arith.addf %25, %26 : vector<2x32xf32>
    %28 = math.tanh %27 : vector<2x32xf32>
    %29 = arith.mulf %24, %28 : vector<2x32xf32>
    %30 = vector.extract_strided_slice %6 {offsets = [2, 0], sizes = [2, 128], strides = [1, 1]} : vector<16x128xf32> to vector<2x128xf32>
    %cst_13 = arith.constant dense<0.000000e+00> : vector<2x128xf32>
    %31 = tpu.matmul %29, %0, %cst_13 {dimension_numbers = #tpu.dot_dimension_numbers<[1], [0], [0], [1], [0, 0, 1, 1], [], []>} : vector<2x32xf32>, vector<32x128xf32>, vector<2x128xf32> -> vector<2x128xf32>
    %32 = arith.addf %30, %31 : vector<2x128xf32>
    %33 = arith.negf %32 : vector<2x128xf32>
    %34 = math.exp %33 : vector<2x128xf32>
    %cst_14 = arith.constant 1.000000e+00 : f32
    %35 = vector.broadcast %cst_14 : f32 to vector<2x128xf32>
    %36 = arith.addf %35, %34 : vector<2x128xf32>
    %37 = arith.divf %35, %36 : vector<2x128xf32>
    %38 = vector.extract_strided_slice %37 {offsets = [0, 0], sizes = [2, 32], strides = [1, 1]} : vector<2x128xf32> to vector<2x32xf32>
    %39 = vector.extract_strided_slice %37 {offsets = [0, 32], sizes = [2, 32], strides = [1, 1]} : vector<2x128xf32> to vector<2x32xf32>
    %40 = vector.extract_strided_slice %37 {offsets = [0, 64], sizes = [2, 32], strides = [1, 1]} : vector<2x128xf32> to vector<2x32xf32>
    %cst_15 = arith.constant 2.000000e+00 : f32
    %41 = vector.broadcast %cst_15 : f32 to vector<2x32xf32>
    %42 = arith.mulf %41, %40 : vector<2x32xf32>
    %cst_16 = arith.constant 1.000000e+00 : f32
    %43 = vector.broadcast %cst_16 : f32 to vector<2x32xf32>
    %44 = arith.subf %42, %43 : vector<2x32xf32>
    %45 = vector.extract_strided_slice %37 {offsets = [0, 96], sizes = [2, 32], strides = [1, 1]} : vector<2x128xf32> to vector<2x32xf32>
    %46 = arith.mulf %39, %27 : vector<2x32xf32>
    %47 = arith.mulf %38, %44 : vector<2x32xf32>
    %48 = arith.addf %46, %47 : vector<2x32xf32>
    %49 = math.tanh %48 : vector<2x32xf32>
    %50 = arith.mulf %45, %49 : vector<2x32xf32>
    %51 = vector.extract_strided_slice %6 {offsets = [4, 0], sizes = [2, 128], strides = [1, 1]} : vector<16x128xf32> to vector<2x128xf32>
    %cst_17 = arith.constant dense<0.000000e+00> : vector<2x128xf32>
    %52 = tpu.matmul %50, %0, %cst_17 {dimension_numbers = #tpu.dot_dimension_numbers<[1], [0], [0], [1], [0, 0, 1, 1], [], []>} : vector<2x32xf32>, vector<32x128xf32>, vector<2x128xf32> -> vector<2x128xf32>
    %53 = arith.addf %51, %52 : vector<2x128xf32>
    %54 = arith.negf %53 : vector<2x128xf32>
    %55 = math.exp %54 : vector<2x128xf32>
    %cst_18 = arith.constant 1.000000e+00 : f32
    %56 = vector.broadcast %cst_18 : f32 to vector<2x128xf32>
    %57 = arith.addf %56, %55 : vector<2x128xf32>
    %58 = arith.divf %56, %57 : vector<2x128xf32>
    %59 = vector.extract_strided_slice %58 {offsets = [0, 0], sizes = [2, 32], strides = [1, 1]} : vector<2x128xf32> to vector<2x32xf32>
    %60 = vector.extract_strided_slice %58 {offsets = [0, 32], sizes = [2, 32], strides = [1, 1]} : vector<2x128xf32> to vector<2x32xf32>
    %61 = vector.extract_strided_slice %58 {offsets = [0, 64], sizes = [2, 32], strides = [1, 1]} : vector<2x128xf32> to vector<2x32xf32>
    %cst_19 = arith.constant 2.000000e+00 : f32
    %62 = vector.broadcast %cst_19 : f32 to vector<2x32xf32>
    %63 = arith.mulf %62, %61 : vector<2x32xf32>
    %cst_20 = arith.constant 1.000000e+00 : f32
    %64 = vector.broadcast %cst_20 : f32 to vector<2x32xf32>
    %65 = arith.subf %63, %64 : vector<2x32xf32>
    %66 = vector.extract_strided_slice %58 {offsets = [0, 96], sizes = [2, 32], strides = [1, 1]} : vector<2x128xf32> to vector<2x32xf32>
    %67 = arith.mulf %60, %48 : vector<2x32xf32>
    %68 = arith.mulf %59, %65 : vector<2x32xf32>
    %69 = arith.addf %67, %68 : vector<2x32xf32>
    %70 = math.tanh %69 : vector<2x32xf32>
    %71 = arith.mulf %66, %70 : vector<2x32xf32>
    %72 = vector.extract_strided_slice %6 {offsets = [6, 0], sizes = [2, 128], strides = [1, 1]} : vector<16x128xf32> to vector<2x128xf32>
    %cst_21 = arith.constant dense<0.000000e+00> : vector<2x128xf32>
    %73 = tpu.matmul %71, %0, %cst_21 {dimension_numbers = #tpu.dot_dimension_numbers<[1], [0], [0], [1], [0, 0, 1, 1], [], []>} : vector<2x32xf32>, vector<32x128xf32>, vector<2x128xf32> -> vector<2x128xf32>
    %74 = arith.addf %72, %73 : vector<2x128xf32>
    %75 = arith.negf %74 : vector<2x128xf32>
    %76 = math.exp %75 : vector<2x128xf32>
    %cst_22 = arith.constant 1.000000e+00 : f32
    %77 = vector.broadcast %cst_22 : f32 to vector<2x128xf32>
    %78 = arith.addf %77, %76 : vector<2x128xf32>
    %79 = arith.divf %77, %78 : vector<2x128xf32>
    %80 = vector.extract_strided_slice %79 {offsets = [0, 0], sizes = [2, 32], strides = [1, 1]} : vector<2x128xf32> to vector<2x32xf32>
    %81 = vector.extract_strided_slice %79 {offsets = [0, 32], sizes = [2, 32], strides = [1, 1]} : vector<2x128xf32> to vector<2x32xf32>
    %82 = vector.extract_strided_slice %79 {offsets = [0, 64], sizes = [2, 32], strides = [1, 1]} : vector<2x128xf32> to vector<2x32xf32>
    %cst_23 = arith.constant 2.000000e+00 : f32
    %83 = vector.broadcast %cst_23 : f32 to vector<2x32xf32>
    %84 = arith.mulf %83, %82 : vector<2x32xf32>
    %cst_24 = arith.constant 1.000000e+00 : f32
    %85 = vector.broadcast %cst_24 : f32 to vector<2x32xf32>
    %86 = arith.subf %84, %85 : vector<2x32xf32>
    %87 = vector.extract_strided_slice %79 {offsets = [0, 96], sizes = [2, 32], strides = [1, 1]} : vector<2x128xf32> to vector<2x32xf32>
    %88 = arith.mulf %81, %69 : vector<2x32xf32>
    %89 = arith.mulf %80, %86 : vector<2x32xf32>
    %90 = arith.addf %88, %89 : vector<2x32xf32>
    %91 = math.tanh %90 : vector<2x32xf32>
    %92 = arith.mulf %87, %91 : vector<2x32xf32>
    %93 = vector.extract_strided_slice %6 {offsets = [8, 0], sizes = [2, 128], strides = [1, 1]} : vector<16x128xf32> to vector<2x128xf32>
    %cst_25 = arith.constant dense<0.000000e+00> : vector<2x128xf32>
    %94 = tpu.matmul %92, %0, %cst_25 {dimension_numbers = #tpu.dot_dimension_numbers<[1], [0], [0], [1], [0, 0, 1, 1], [], []>} : vector<2x32xf32>, vector<32x128xf32>, vector<2x128xf32> -> vector<2x128xf32>
    %95 = arith.addf %93, %94 : vector<2x128xf32>
    %96 = arith.negf %95 : vector<2x128xf32>
    %97 = math.exp %96 : vector<2x128xf32>
    %cst_26 = arith.constant 1.000000e+00 : f32
    %98 = vector.broadcast %cst_26 : f32 to vector<2x128xf32>
    %99 = arith.addf %98, %97 : vector<2x128xf32>
    %100 = arith.divf %98, %99 : vector<2x128xf32>
    %101 = vector.extract_strided_slice %100 {offsets = [0, 0], sizes = [2, 32], strides = [1, 1]} : vector<2x128xf32> to vector<2x32xf32>
    %102 = vector.extract_strided_slice %100 {offsets = [0, 32], sizes = [2, 32], strides = [1, 1]} : vector<2x128xf32> to vector<2x32xf32>
    %103 = vector.extract_strided_slice %100 {offsets = [0, 64], sizes = [2, 32], strides = [1, 1]} : vector<2x128xf32> to vector<2x32xf32>
    %cst_27 = arith.constant 2.000000e+00 : f32
    %104 = vector.broadcast %cst_27 : f32 to vector<2x32xf32>
    %105 = arith.mulf %104, %103 : vector<2x32xf32>
    %cst_28 = arith.constant 1.000000e+00 : f32
    %106 = vector.broadcast %cst_28 : f32 to vector<2x32xf32>
    %107 = arith.subf %105, %106 : vector<2x32xf32>
    %108 = vector.extract_strided_slice %100 {offsets = [0, 96], sizes = [2, 32], strides = [1, 1]} : vector<2x128xf32> to vector<2x32xf32>
    %109 = arith.mulf %102, %90 : vector<2x32xf32>
    %110 = arith.mulf %101, %107 : vector<2x32xf32>
    %111 = arith.addf %109, %110 : vector<2x32xf32>
    %112 = math.tanh %111 : vector<2x32xf32>
    %113 = arith.mulf %108, %112 : vector<2x32xf32>
    %114 = vector.extract_strided_slice %6 {offsets = [10, 0], sizes = [2, 128], strides = [1, 1]} : vector<16x128xf32> to vector<2x128xf32>
    %cst_29 = arith.constant dense<0.000000e+00> : vector<2x128xf32>
    %115 = tpu.matmul %113, %0, %cst_29 {dimension_numbers = #tpu.dot_dimension_numbers<[1], [0], [0], [1], [0, 0, 1, 1], [], []>} : vector<2x32xf32>, vector<32x128xf32>, vector<2x128xf32> -> vector<2x128xf32>
    %116 = arith.addf %114, %115 : vector<2x128xf32>
    %117 = arith.negf %116 : vector<2x128xf32>
    %118 = math.exp %117 : vector<2x128xf32>
    %cst_30 = arith.constant 1.000000e+00 : f32
    %119 = vector.broadcast %cst_30 : f32 to vector<2x128xf32>
    %120 = arith.addf %119, %118 : vector<2x128xf32>
    %121 = arith.divf %119, %120 : vector<2x128xf32>
    %122 = vector.extract_strided_slice %121 {offsets = [0, 0], sizes = [2, 32], strides = [1, 1]} : vector<2x128xf32> to vector<2x32xf32>
    %123 = vector.extract_strided_slice %121 {offsets = [0, 32], sizes = [2, 32], strides = [1, 1]} : vector<2x128xf32> to vector<2x32xf32>
    %124 = vector.extract_strided_slice %121 {offsets = [0, 64], sizes = [2, 32], strides = [1, 1]} : vector<2x128xf32> to vector<2x32xf32>
    %cst_31 = arith.constant 2.000000e+00 : f32
    %125 = vector.broadcast %cst_31 : f32 to vector<2x32xf32>
    %126 = arith.mulf %125, %124 : vector<2x32xf32>
    %cst_32 = arith.constant 1.000000e+00 : f32
    %127 = vector.broadcast %cst_32 : f32 to vector<2x32xf32>
    %128 = arith.subf %126, %127 : vector<2x32xf32>
    %129 = vector.extract_strided_slice %121 {offsets = [0, 96], sizes = [2, 32], strides = [1, 1]} : vector<2x128xf32> to vector<2x32xf32>
    %130 = arith.mulf %123, %111 : vector<2x32xf32>
    %131 = arith.mulf %122, %128 : vector<2x32xf32>
    %132 = arith.addf %130, %131 : vector<2x32xf32>
    %133 = math.tanh %132 : vector<2x32xf32>
    %134 = arith.mulf %129, %133 : vector<2x32xf32>
    %135 = vector.extract_strided_slice %6 {offsets = [12, 0], sizes = [2, 128], strides = [1, 1]} : vector<16x128xf32> to vector<2x128xf32>
    %cst_33 = arith.constant dense<0.000000e+00> : vector<2x128xf32>
    %136 = tpu.matmul %134, %0, %cst_33 {dimension_numbers = #tpu.dot_dimension_numbers<[1], [0], [0], [1], [0, 0, 1, 1], [], []>} : vector<2x32xf32>, vector<32x128xf32>, vector<2x128xf32> -> vector<2x128xf32>
    %137 = arith.addf %135, %136 : vector<2x128xf32>
    %138 = arith.negf %137 : vector<2x128xf32>
    %139 = math.exp %138 : vector<2x128xf32>
    %cst_34 = arith.constant 1.000000e+00 : f32
    %140 = vector.broadcast %cst_34 : f32 to vector<2x128xf32>
    %141 = arith.addf %140, %139 : vector<2x128xf32>
    %142 = arith.divf %140, %141 : vector<2x128xf32>
    %143 = vector.extract_strided_slice %142 {offsets = [0, 0], sizes = [2, 32], strides = [1, 1]} : vector<2x128xf32> to vector<2x32xf32>
    %144 = vector.extract_strided_slice %142 {offsets = [0, 32], sizes = [2, 32], strides = [1, 1]} : vector<2x128xf32> to vector<2x32xf32>
    %145 = vector.extract_strided_slice %142 {offsets = [0, 64], sizes = [2, 32], strides = [1, 1]} : vector<2x128xf32> to vector<2x32xf32>
    %cst_35 = arith.constant 2.000000e+00 : f32
    %146 = vector.broadcast %cst_35 : f32 to vector<2x32xf32>
    %147 = arith.mulf %146, %145 : vector<2x32xf32>
    %cst_36 = arith.constant 1.000000e+00 : f32
    %148 = vector.broadcast %cst_36 : f32 to vector<2x32xf32>
    %149 = arith.subf %147, %148 : vector<2x32xf32>
    %150 = vector.extract_strided_slice %142 {offsets = [0, 96], sizes = [2, 32], strides = [1, 1]} : vector<2x128xf32> to vector<2x32xf32>
    %151 = arith.mulf %144, %132 : vector<2x32xf32>
    %152 = arith.mulf %143, %149 : vector<2x32xf32>
    %153 = arith.addf %151, %152 : vector<2x32xf32>
    %154 = math.tanh %153 : vector<2x32xf32>
    %155 = arith.mulf %150, %154 : vector<2x32xf32>
    %156 = vector.extract_strided_slice %6 {offsets = [14, 0], sizes = [2, 128], strides = [1, 1]} : vector<16x128xf32> to vector<2x128xf32>
    %cst_37 = arith.constant dense<0.000000e+00> : vector<2x128xf32>
    %157 = tpu.matmul %155, %0, %cst_37 {dimension_numbers = #tpu.dot_dimension_numbers<[1], [0], [0], [1], [0, 0, 1, 1], [], []>} : vector<2x32xf32>, vector<32x128xf32>, vector<2x128xf32> -> vector<2x128xf32>
    %158 = arith.addf %156, %157 : vector<2x128xf32>
    %159 = arith.negf %158 : vector<2x128xf32>
    %160 = math.exp %159 : vector<2x128xf32>
    %cst_38 = arith.constant 1.000000e+00 : f32
    %161 = vector.broadcast %cst_38 : f32 to vector<2x128xf32>
    %162 = arith.addf %161, %160 : vector<2x128xf32>
    %163 = arith.divf %161, %162 : vector<2x128xf32>
    %164 = vector.extract_strided_slice %163 {offsets = [0, 0], sizes = [2, 32], strides = [1, 1]} : vector<2x128xf32> to vector<2x32xf32>
    %165 = vector.extract_strided_slice %163 {offsets = [0, 32], sizes = [2, 32], strides = [1, 1]} : vector<2x128xf32> to vector<2x32xf32>
    %166 = vector.extract_strided_slice %163 {offsets = [0, 64], sizes = [2, 32], strides = [1, 1]} : vector<2x128xf32> to vector<2x32xf32>
    %cst_39 = arith.constant 2.000000e+00 : f32
    %167 = vector.broadcast %cst_39 : f32 to vector<2x32xf32>
    %168 = arith.mulf %167, %166 : vector<2x32xf32>
    %cst_40 = arith.constant 1.000000e+00 : f32
    %169 = vector.broadcast %cst_40 : f32 to vector<2x32xf32>
    %170 = arith.subf %168, %169 : vector<2x32xf32>
    %171 = vector.extract_strided_slice %163 {offsets = [0, 96], sizes = [2, 32], strides = [1, 1]} : vector<2x128xf32> to vector<2x32xf32>
    %172 = arith.mulf %165, %153 : vector<2x32xf32>
    %173 = arith.mulf %164, %170 : vector<2x32xf32>
    %174 = arith.addf %172, %173 : vector<2x32xf32>
    %175 = math.tanh %174 : vector<2x32xf32>
    %176 = arith.mulf %171, %175 : vector<2x32xf32>
    %c0_41 = arith.constant 0 : index
    %c0_42 = arith.constant 0 : index
    %177 = vector.load %arg4[%c0_41, %c0_42] : memref<32x128xf32, #tpu.memory_space<vmem>>, vector<32x128xf32>
    %cst_43 = arith.constant dense<0.000000e+00> : vector<2x128xf32>
    %178 = tpu.matmul %176, %177, %cst_43 {dimension_numbers = #tpu.dot_dimension_numbers<[1], [0], [0], [1], [0, 0, 1, 1], [], []>} : vector<2x32xf32>, vector<32x128xf32>, vector<2x128xf32> -> vector<2x128xf32>
    %c0_44 = arith.constant 0 : index
    %c0_45 = arith.constant 0 : index
    %179 = vector.load %arg5[%c0_44, %c0_45] : memref<1x128xf32, #tpu.memory_space<vmem>>, vector<1x128xf32>
    %180 = vector.broadcast %179 : vector<1x128xf32> to vector<2x128xf32>
    %181 = arith.addf %178, %180 : vector<2x128xf32>
    %cst_46 = arith.constant 0.000000e+00 : f32
    %182 = vector.broadcast %cst_46 : f32 to vector<2x128xf32>
    %183 = arith.maximumf %181, %182 : vector<2x128xf32>
    %c0_47 = arith.constant 0 : index
    %c0_48 = arith.constant 0 : index
    %184 = vector.load %arg6[%c0_47, %c0_48] : memref<128x24xf32, #tpu.memory_space<vmem>>, vector<128x24xf32>
    %cst_49 = arith.constant dense<0.000000e+00> : vector<2x24xf32>
    %185 = tpu.matmul %183, %184, %cst_49 {dimension_numbers = #tpu.dot_dimension_numbers<[1], [0], [0], [1], [0, 0, 1, 1], [], []>} : vector<2x128xf32>, vector<128x24xf32>, vector<2x24xf32> -> vector<2x24xf32>
    %c0_50 = arith.constant 0 : index
    %c0_51 = arith.constant 0 : index
    %186 = vector.load %arg7[%c0_50, %c0_51] : memref<1x24xf32, #tpu.memory_space<vmem>>, vector<1x24xf32>
    %187 = vector.broadcast %186 : vector<1x24xf32> to vector<2x24xf32>
    %188 = arith.addf %185, %187 : vector<2x24xf32>
    %189 = vector.extract_strided_slice %188 {offsets = [0, 0], sizes = [2, 8], strides = [1, 1]} : vector<2x24xf32> to vector<2x8xf32>
    %cst_52 = arith.constant dense<0xFF800000> : vector<2xf32>
    %190 = vector.multi_reduction <maximumf>, %189, %cst_52 [1] : vector<2x8xf32> to vector<2xf32>
    %191 = vector.shape_cast %190 : vector<2xf32> to vector<2x1xf32>
    %192 = vector.broadcast %191 : vector<2x1xf32> to vector<2x8xf32>
    %193 = arith.subf %189, %192 : vector<2x8xf32>
    %194 = math.exp %193 : vector<2x8xf32>
    %cst_53 = arith.constant dense<0.000000e+00> : vector<2xf32>
    %195 = vector.multi_reduction <add>, %194, %cst_53 [1] : vector<2x8xf32> to vector<2xf32>
    %196 = vector.shape_cast %195 : vector<2xf32> to vector<2x1xf32>
    %197 = vector.broadcast %196 : vector<2x1xf32> to vector<2x8xf32>
    %198 = arith.divf %194, %197 : vector<2x8xf32>
    %c0_54 = arith.constant 0 : index
    %c0_55 = arith.constant 0 : index
    %199 = vector.load %arg8[%c0_54, %c0_55] : memref<2x24xf32, #tpu.memory_space<vmem>>, vector<2x8xf32>
    tpu.vector_store %arg8[%c0_54, %c0_55], %198 {strides = array<i32>} : memref<2x24xf32, #tpu.memory_space<vmem>>, vector<2x8xf32>,
    %200 = vector.extract_strided_slice %188 {offsets = [0, 8], sizes = [2, 8], strides = [1, 1]} : vector<2x24xf32> to vector<2x8xf32>
    %cst_56 = arith.constant dense<0xFF800000> : vector<2xf32>
    %201 = vector.multi_reduction <maximumf>, %200, %cst_56 [1] : vector<2x8xf32> to vector<2xf32>
    %202 = vector.shape_cast %201 : vector<2xf32> to vector<2x1xf32>
    %203 = vector.broadcast %202 : vector<2x1xf32> to vector<2x8xf32>
    %204 = arith.subf %200, %203 : vector<2x8xf32>
    %205 = math.exp %204 : vector<2x8xf32>
    %cst_57 = arith.constant dense<0.000000e+00> : vector<2xf32>
    %206 = vector.multi_reduction <add>, %205, %cst_57 [1] : vector<2x8xf32> to vector<2xf32>
    %207 = vector.shape_cast %206 : vector<2xf32> to vector<2x1xf32>
    %208 = vector.broadcast %207 : vector<2x1xf32> to vector<2x8xf32>
    %209 = arith.divf %205, %208 : vector<2x8xf32>
    %c0_58 = arith.constant 0 : index
    %c8 = arith.constant 8 : index
    %210 = vector.load %arg8[%c0_58, %c8] : memref<2x24xf32, #tpu.memory_space<vmem>>, vector<2x8xf32>
    tpu.vector_store %arg8[%c0_58, %c8], %209 {strides = array<i32>} : memref<2x24xf32, #tpu.memory_space<vmem>>, vector<2x8xf32>,
    %211 = vector.extract_strided_slice %188 {offsets = [0, 16], sizes = [2, 8], strides = [1, 1]} : vector<2x24xf32> to vector<2x8xf32>
    %cst_59 = arith.constant dense<0xFF800000> : vector<2xf32>
    %212 = vector.multi_reduction <maximumf>, %211, %cst_59 [1] : vector<2x8xf32> to vector<2xf32>
    %213 = vector.shape_cast %212 : vector<2xf32> to vector<2x1xf32>
    %214 = vector.broadcast %213 : vector<2x1xf32> to vector<2x8xf32>
    %215 = arith.subf %211, %214 : vector<2x8xf32>
    %216 = math.exp %215 : vector<2x8xf32>
    %cst_60 = arith.constant dense<0.000000e+00> : vector<2xf32>
    %217 = vector.multi_reduction <add>, %216, %cst_60 [1] : vector<2x8xf32> to vector<2xf32>
    %218 = vector.shape_cast %217 : vector<2xf32> to vector<2x1xf32>
    %219 = vector.broadcast %218 : vector<2x1xf32> to vector<2x8xf32>
    %220 = arith.divf %216, %219 : vector<2x8xf32>
    %c0_61 = arith.constant 0 : index
    %c16 = arith.constant 16 : index
    %221 = vector.load %arg8[%c0_61, %c16] : memref<2x24xf32, #tpu.memory_space<vmem>>, vector<2x8xf32>
    tpu.vector_store %arg8[%c0_61, %c16], %220 {strides = array<i32>} : memref<2x24xf32, #tpu.memory_space<vmem>>, vector<2x8xf32>,
    return
  }
}

</mosaic_0001>

<llo_original>
// kernel: tpu_custom_call.1
$region0: #{tpu_custom_call.1}
  #allocation0 [shape = 'u32[]', space=smem, size = 0x4, offset = 0x4, fixed_abs, tag = 'smem constant byte address 0x4 - core index']
  #allocation1 [shape = 'u32[144,128]{1,0:T(1,128)}', space=vmem, size = 0x12000, scoped, tag = 'internal scratch']
  %s0 = inlined_call_operand.vmem [shape: f32[16,16], index: 0, kind: input, shape index: {}]
  %s1 = inlined_call_operand.vmem [shape: f32[16,128], index: 1, kind: input, shape index: {}]
  %s2 = inlined_call_operand.vmem [shape: f32[32,128], index: 2, kind: input, shape index: {}]
  %s3 = inlined_call_operand.vmem [shape: f32[1,128], index: 3, kind: input, shape index: {}]
  %s4 = inlined_call_operand.vmem [shape: f32[32,128], index: 4, kind: input, shape index: {}]
  %s5 = inlined_call_operand.vmem [shape: f32[1,128], index: 5, kind: input, shape index: {}]
  %s6 = inlined_call_operand.vmem [shape: f32[128,24], index: 6, kind: input, shape index: {}]
  %s7 = inlined_call_operand.vmem [shape: f32[1,24], index: 7, kind: input, shape index: {}]
  %s8 = inlined_call_operand.hbm [shape: f32[2,24], index: 8, kind: output, shape index: {}]
  %s9 = sld [smem:[#allocation0]]
  $region42: #{tpu_custom_call.1} parent=0
    _
  %s11 = ssub.s32 1, %s9
  %s12 = scalar_select 0, %s11, %s9
  $region1: #{tpu_custom_call.1} parent=0
    #allocation2 [shape = 'u8[1024]{0}', space=vmem, size = 0x400, scoped, tag = 'output window, operand 0, single buffered']
    #allocation3 [shape = 's32[1]{0}', space=sflag, size = 0x4, scoped, tag = 'scoped memory for tpu_custom_call.1']
    %13 = vsyncpa [#allocation3], 0
    // Predicated region
    $region2: #{tpu_custom_call.1} parent=1 // pred_check
      _
    $region3: #{tpu_custom_call.1} parent=1 // pred_check_branch
      %15 = sbr.rel (0) target = $region5
    $region4: #{tpu_custom_call.1} parent=1 // pred_region
      _
    $region5: #{tpu_custom_call.1} parent=1 // pred_fallthru
      _
    // Predicated region
    $region6: #{tpu_custom_call.1} parent=1 // pred_check
      _
    $region7: #{tpu_custom_call.1} parent=1 // pred_check_branch
      %17 = sbr.rel (0) target = $region9
    $region8: #{tpu_custom_call.1} parent=1 // pred_region
      _
    $region9: #{tpu_custom_call.1} parent=1 // pred_fallthru
      _
    // Predicated region
    $region10: #{tpu_custom_call.1} parent=1 // pred_check
      _
    $region11: #{tpu_custom_call.1} parent=1 // pred_check_branch
      %19 = sbr.rel (0) target = $region13
    $region12: #{tpu_custom_call.1} parent=1 // pred_region
      _
    $region13: #{tpu_custom_call.1} parent=1 // pred_fallthru
      _
    // Predicated region
    $region14: #{tpu_custom_call.1} parent=1 // pred_check
      _
    $region15: #{tpu_custom_call.1} parent=1 // pred_check_branch
      %21 = sbr.rel (0) target = $region17
    $region16: #{tpu_custom_call.1} parent=1 // pred_region
      _
    $region17: #{tpu_custom_call.1} parent=1 // pred_fallthru
      _
    // Predicated region
    $region18: #{tpu_custom_call.1} parent=1 // pred_check
      _
    $region19: #{tpu_custom_call.1} parent=1 // pred_check_branch
      %23 = sbr.rel (0) target = $region21
    $region20: #{tpu_custom_call.1} parent=1 // pred_region
      _
    $region21: #{tpu_custom_call.1} parent=1 // pred_fallthru
      _
    // Predicated region
    $region22: #{tpu_custom_call.1} parent=1 // pred_check
      _
    $region23: #{tpu_custom_call.1} parent=1 // pred_check_branch
      %25 = sbr.rel (0) target = $region25
    $region24: #{tpu_custom_call.1} parent=1 // pred_region
      _
    $region25: #{tpu_custom_call.1} parent=1 // pred_fallthru
      _
    // Predicated region
    $region26: #{tpu_custom_call.1} parent=1 // pred_check
      _
    $region27: #{tpu_custom_call.1} parent=1 // pred_check_branch
      %27 = sbr.rel (0) target = $region29
    $region28: #{tpu_custom_call.1} parent=1 // pred_region
      _
    $region29: #{tpu_custom_call.1} parent=1 // pred_fallthru
      _
    // Predicated region
    $region30: #{tpu_custom_call.1} parent=1 // pred_check
      _
    $region31: #{tpu_custom_call.1} parent=1 // pred_check_branch
      %29 = sbr.rel (0) target = $region33
    $region32: #{tpu_custom_call.1} parent=1 // pred_region
      _
    $region33: #{tpu_custom_call.1} parent=1 // pred_fallthru
      _
    %v30 = vld [vmem:[%s2] sm:$0xff]
    %v31 = vld [vmem:[%s2 + $0x8] sm:$0xff]
    %v32 = vld [vmem:[%s2 + $0x10] sm:$0xff]
    %v33 = vld [vmem:[%s2 + $0x18] sm:$0xff]
    %v34 = vld [vmem:[%s0] sm:$0xff]
    %v35 = vld [vmem:[%s0 + $0x8] sm:$0xff]
    %v36 = vld [vmem:[%s1] sm:$0xff]
    %v37 = vld [vmem:[%s1 + $0x8] sm:$0xff]
    %v38 = vld [vmem:[%s3] sm:$0x1]
    %v40 = vlaneseq
    %v41 = vshrl.u32 %v40, 7
    %v42 = vsub.s32 0, %v41
    %v43 = vrot.slane %v38, %v42
    %vm45 = vcmask 130048
    %v47 = vsel %vm45, %v34, 0
    %v50 = vsel %vm45, %v35, 0
    %52 = vmatprep.subr.mxu0 0.0
    %53 = vmatpush1.msra.mxu0 0.0
    %54 = vmatprep.subr.mxu0 0.0
    %55 = vmatpush1.msra.mxu0 0.0
    %56 = vmatprep.subr.mxu0 0.0
    %57 = vmatpush1.msra.mxu0 0.0
    %58 = vmatprep.subr.mxu0 0.0
    %59 = vmatpush1.msra.mxu0 0.0
    %60 = vmatprep.subr.mxu0 0.0
    %61 = vmatpush1.msra.mxu0 0.0
    %62 = vmatprep.subr.mxu0 0.0
    %63 = vmatpush1.msra.mxu0 0.0
    %64 = vmatprep.subr.mxu0 0.0
    %65 = vmatpush1.msra.mxu0 0.0
    %66 = vmatprep.subr.mxu0 0.0
    %67 = vmatpush1.msra.mxu0 0.0
    %68 = vmatprep.subr.mxu0 0.0
    %69 = vmatpush1.msra.mxu0 0.0
    %70 = vmatprep.subr.mxu0 0.0
    %71 = vmatpush1.msra.mxu0 0.0
    %72 = vmatprep.subr.mxu0 0.0
    %73 = vmatpush1.msra.mxu0 0.0
    %74 = vmatprep.subr.mxu0 0.0
    %75 = vmatpush1.msra.mxu0 0.0
    %76 = vmatprep.subr.mxu0 0.0
    %77 = vmatpush1.msra.mxu0 0.0
    %78 = vmatprep.subr.mxu0 0.0
    %79 = vmatpush1.msra.mxu0 0.0
    %80 = vmatprep.subr.mxu0 0.0
    %81 = vmatpush1.msra.mxu0 %v37
    %82 = vmatprep.subr.mxu0 0.0
    %83 = vmatpush1.msra.mxu0 %v36
    %84 = vmatprep.subr.mxu0 0.0
    %85 = vmatpush2.msra.mxu0 0.0
    %86 = vmatprep.subr.mxu0 0.0
    %87 = vmatpush2.msra.mxu0 0.0
    %88 = vmatprep.subr.mxu0 0.0
    %89 = vmatpush2.msra.mxu0 0.0
    %90 = vmatprep.subr.mxu0 0.0
    %91 = vmatpush2.msra.mxu0 0.0
    %92 = vmatprep.subr.mxu0 0.0
    %93 = vmatpush2.msra.mxu0 0.0
    %94 = vmatprep.subr.mxu0 0.0
    %95 = vmatpush2.msra.mxu0 0.0
    %96 = vmatprep.subr.mxu0 0.0
    %97 = vmatpush2.msra.mxu0 0.0
    %98 = vmatprep.subr.mxu0 0.0
    %99 = vmatpush2.msra.mxu0 0.0
    %100 = vmatprep.subr.mxu0 0.0
    %101 = vmatpush2.msra.mxu0 0.0
    %102 = vmatprep.subr.mxu0 0.0
    %103 = vmatpush2.msra.mxu0 0.0
    %104 = vmatprep.subr.mxu0 0.0
    %105 = vmatpush2.msra.mxu0 0.0
    %106 = vmatprep.subr.mxu0 0.0
    %107 = vmatpush2.msra.mxu0 0.0
    %108 = vmatprep.subr.mxu0 0.0
    %109 = vmatpush2.msra.mxu0 0.0
    %110 = vmatprep.subr.mxu0 0.0
    %111 = vmatpush2.msra.mxu0 0.0
    %112 = vmatprep.subr.mxu0 0.0
    %113 = vmatpush2.msra.mxu0 0.0
    %114 = vmatprep.subr.mxu0 0.0
    %115 = vmatpush2.msra.mxu0 0.0
    %116 = vmatprep.mubr.f32.mxu0 0.0
    %117 = vmatmul.mubr.f32.gmra.mxu0 %v47
    %v118 = vpop.f32.mrf.mxu0
    %v119 = vadd.f32 %v43, %v118
    %v120 = vpop.f32.mrf.mxu0
    %121 = vmatprep.mubr.f32.mxu0 0.0
    %122 = vmatmul.mubr.f32.gmra.mxu0 %v50
    %v123 = vpop.f32.mrf.mxu0
    %v124 = vadd.f32 %v43, %v123
    %v125 = vpop.f32.mrf.mxu0
    %126 = vdwg.mxu0
    %vm127 = vcmask 261120
    %v129 = vsel %vm127, 0.0, 0
    %131 = vmatprep.subr.mxu0 0.0
    %132 = vmatpush1.msra.mxu0 0.0
    %133 = vmatprep.subr.mxu0 0.0
    %134 = vmatpush1.msra.mxu0 0.0
    %135 = vmatprep.subr.mxu0 0.0
    %136 = vmatpush1.msra.mxu0 0.0
    %137 = vmatprep.subr.mxu0 0.0
    %138 = vmatpush1.msra.mxu0 0.0
    %139 = vmatprep.subr.mxu0 0.0
    %140 = vmatpush1.msra.mxu0 0.0
    %141 = vmatprep.subr.mxu0 0.0
    %142 = vmatpush1.msra.mxu0 0.0
    %143 = vmatprep.subr.mxu0 0.0
    %144 = vmatpush1.msra.mxu0 0.0
    %145 = vmatprep.subr.mxu0 0.0
    %146 = vmatpush1.msra.mxu0 0.0
    %147 = vmatprep.subr.mxu0 0.0
    %148 = vmatpush1.msra.mxu0 0.0
    %149 = vmatprep.subr.mxu0 0.0
    %150 = vmatpush1.msra.mxu0 0.0
    %151 = vmatprep.subr.mxu0 0.0
    %152 = vmatpush1.msra.mxu0 0.0
    %153 = vmatprep.subr.mxu0 0.0
    %154 = vmatpush1.msra.mxu0 0.0
    %155 = vmatprep.subr.mxu0 0.0
    %156 = vmatpush1.msra.mxu0 %v33
    %157 = vmatprep.subr.mxu0 0.0
    %158 = vmatpush1.msra.mxu0 %v32
    %159 = vmatprep.subr.mxu0 0.0
    %160 = vmatpush1.msra.mxu0 %v31
    %161 = vmatprep.subr.mxu0 0.0
    %162 = vmatpush1.msra.mxu0 %v30
    %163 = vmatprep.subr.mxu0 0.0
    %164 = vmatpush2.msra.mxu0 0.0
    %165 = vmatprep.subr.mxu0 0.0
    %166 = vmatpush2.msra.mxu0 0.0
    %167 = vmatprep.subr.mxu0 0.0
    %168 = vmatpush2.msra.mxu0 0.0
    %169 = vmatprep.subr.mxu0 0.0
    %170 = vmatpush2.msra.mxu0 0.0
    %171 = vmatprep.subr.mxu0 0.0
    %172 = vmatpush2.msra.mxu0 0.0
    %173 = vmatprep.subr.mxu0 0.0
    %174 = vmatpush2.msra.mxu0 0.0
    %175 = vmatprep.subr.mxu0 0.0
    %176 = vmatpush2.msra.mxu0 0.0
    %177 = vmatprep.subr.mxu0 0.0
    %178 = vmatpush2.msra.mxu0 0.0
    %179 = vmatprep.subr.mxu0 0.0
    %180 = vmatpush2.msra.mxu0 0.0
    %181 = vmatprep.subr.mxu0 0.0
    %182 = vmatpush2.msra.mxu0 0.0
    %183 = vmatprep.subr.mxu0 0.0
    %184 = vmatpush2.msra.mxu0 0.0
    %185 = vmatprep.subr.mxu0 0.0
    %186 = vmatpush2.msra.mxu0 0.0
    %187 = vmatprep.subr.mxu0 0.0
    %188 = vmatpush2.msra.mxu0 0.0
    %189 = vmatprep.subr.mxu0 0.0
    %190 = vmatpush2.msra.mxu0 0.0
    %191 = vmatprep.subr.mxu0 0.0
    %192 = vmatpush2.msra.mxu0 0.0
    %193 = vmatprep.subr.mxu0 0.0
    %194 = vmatpush2.msra.mxu0 0.0
    %195 = vmatprep.mubr.f32.mxu0 0.0
    %196 = vmatmul.mubr.f32.gmra.mxu0 %v129
    %v197 = vpop.f32.mrf.mxu0
    %v198 = vadd.f32 0.0, %v197
    %v199 = vpop.f32.mrf.mxu0
    %200 = vdwg.mxu0
    %v201 = vadd.f32 %v119, %v198
    %v202 = vxor.u32 %v201, 2147483648
    %v203 = vmul.f32 %v202, 1.442695
    %v204 = vpow.pop %v203
    %v205 = vadd.f32 %v204, 1.0
    %v206 = vrcp.pop %v205
    %v207 = vmul.f32 1.0, %v206
    %v208 = vmul.f32 %v207, 2.0
    %v209 = vsub.f32 %v208, 1.0
    %v210 = vmul.f32 %v207, 0.0
    %212 = vrot.lane.b32.xlu0 %v209, 64
    %v213 = vpop.permute.xlu0 %212
    %v215 = vmul.f32 %v207, %v213
    %217 = vrot.lane.b32.xlu0 %v215, 32
    %v218 = vpop.permute.xlu0 %217
    %v220 = vadd.f32 %v210, %v218
    %v221 = vtanh.pop %v220
    %223 = vrot.lane.b32.xlu0 %v221, 64
    %v224 = vpop.permute.xlu0 %223
    %v226 = vmul.f32 %v207, %v224
    %228 = vrot.lane.b32.xlu0 %v226, 32
    %v229 = vpop.permute.xlu0 %228
    %v230 = vsel %vm127, %v229, 0
    %232 = vmatprep.subr.mxu0 0.0
    %233 = vmatpush1.msra.mxu0 0.0
    %234 = vmatprep.subr.mxu0 0.0
    %235 = vmatpush1.msra.mxu0 0.0
    %236 = vmatprep.subr.mxu0 0.0
    %237 = vmatpush1.msra.mxu0 0.0
    %238 = vmatprep.subr.mxu0 0.0
    %239 = vmatpush1.msra.mxu0 0.0
    %240 = vmatprep.subr.mxu0 0.0
    %241 = vmatpush1.msra.mxu0 0.0
    %242 = vmatprep.subr.mxu0 0.0
    %243 = vmatpush1.msra.mxu0 0.0
    %244 = vmatprep.subr.mxu0 0.0
    %245 = vmatpush1.msra.mxu0 0.0
    %246 = vmatprep.subr.mxu0 0.0
    %247 = vmatpush1.msra.mxu0 0.0
    %248 = vmatprep.subr.mxu0 0.0
    %249 = vmatpush1.msra.mxu0 0.0
    %250 = vmatprep.subr.mxu0 0.0
    %251 = vmatpush1.msra.mxu0 0.0
    %252 = vmatprep.subr.mxu0 0.0
    %253 = vmatpush1.msra.mxu0 0.0
    %254 = vmatprep.subr.mxu0 0.0
    %255 = vmatpush1.msra.mxu0 0.0
    %256 = vmatprep.subr.mxu0 0.0
    %257 = vmatpush1.msra.mxu0 %v33
    %258 = vmatprep.subr.mxu0 0.0
    %259 = vmatpush1.msra.mxu0 %v32
    %260 = vmatprep.subr.mxu0 0.0
    %261 = vmatpush1.msra.mxu0 %v31
    %262 = vmatprep.subr.mxu0 0.0
    %263 = vmatpush1.msra.mxu0 %v30
    %264 = vmatprep.subr.mxu0 0.0
    %265 = vmatpush2.msra.mxu0 0.0
    %266 = vmatprep.subr.mxu0 0.0
    %267 = vmatpush2.msra.mxu0 0.0
    %268 = vmatprep.subr.mxu0 0.0
    %269 = vmatpush2.msra.mxu0 0.0
    %270 = vmatprep.subr.mxu0 0.0
    %271 = vmatpush2.msra.mxu0 0.0
    %272 = vmatprep.subr.mxu0 0.0
    %273 = vmatpush2.msra.mxu0 0.0
    %274 = vmatprep.subr.mxu0 0.0
    %275 = vmatpush2.msra.mxu0 0.0
    %276 = vmatprep.subr.mxu0 0.0
    %277 = vmatpush2.msra.mxu0 0.0
    %278 = vmatprep.subr.mxu0 0.0
    %279 = vmatpush2.msra.mxu0 0.0
    %280 = vmatprep.subr.mxu0 0.0
    %281 = vmatpush2.msra.mxu0 0.0
    %282 = vmatprep.subr.mxu0 0.0
    %283 = vmatpush2.msra.mxu0 0.0
    %284 = vmatprep.subr.mxu0 0.0
    %285 = vmatpush2.msra.mxu0 0.0
    %286 = vmatprep.subr.mxu0 0.0
    %287 = vmatpush2.msra.mxu0 0.0
    %288 = vmatprep.subr.mxu0 0.0
    %289 = vmatpush2.msra.mxu0 0.0
    %290 = vmatprep.subr.mxu0 0.0
    %291 = vmatpush2.msra.mxu0 0.0
    %292 = vmatprep.subr.mxu0 0.0
    %293 = vmatpush2.msra.mxu0 0.0
    %294 = vmatprep.subr.mxu0 0.0
    %295 = vmatpush2.msra.mxu0 0.0
    %296 = vmatprep.mubr.f32.mxu0 0.0
    %297 = vmatmul.mubr.f32.gmra.mxu0 %v230
    %v298 = vpop.f32.mrf.mxu0
    %v299 = vadd.f32 0.0, %v298
    %v300 = vpop.f32.mrf.mxu0
    %301 = vdwg.mxu0
    %v303 = vrot.slane %v299, 6
    %v305 = vadd.f32 %v119, %v303
    %v306 = vxor.u32 %v305, 2147483648
    %v307 = vmul.f32 %v306, 1.442695
    %v308 = vpow.pop %v307
    %v309 = vadd.f32 %v308, 1.0
    %v310 = vrcp.pop %v309
    %v311 = vmul.f32 1.0, %v310
    %v312 = vmul.f32 %v311, 2.0
    %v313 = vsub.f32 %v312, 1.0
    %v315 = vrot.slane %v220, 6
    %v317 = vmul.f32 %v311, %v315
    %319 = vrot.lane.b32.xlu0 %v313, 64
    %v320 = vpop.permute.xlu0 %319
    %v322 = vmul.f32 %v311, %v320
    %324 = vrot.lane.b32.xlu0 %v322, 32
    %v325 = vpop.permute.xlu0 %324
    %v327 = vadd.f32 %v317, %v325
    %v328 = vtanh.pop %v327
    %330 = vrot.lane.b32.xlu0 %v328, 64
    %v331 = vpop.permute.xlu0 %330
    %v333 = vmul.f32 %v311, %v331
    %v335 = vrot.slane %v333, 2
    %336 = vrot.lane.b32.xlu0 %v335, 32
    %v337 = vpop.permute.xlu0 %336
    %v338 = vsel %vm127, %v337, 0
    %340 = vmatprep.subr.mxu0 0.0
    %341 = vmatpush1.msra.mxu0 0.0
    %342 = vmatprep.subr.mxu0 0.0
    %343 = vmatpush1.msra.mxu0 0.0
    %344 = vmatprep.subr.mxu0 0.0
    %345 = vmatpush1.msra.mxu0 0.0
    %346 = vmatprep.subr.mxu0 0.0
    %347 = vmatpush1.msra.mxu0 0.0
    %348 = vmatprep.subr.mxu0 0.0
    %349 = vmatpush1.msra.mxu0 0.0
    %350 = vmatprep.subr.mxu0 0.0
    %351 = vmatpush1.msra.mxu0 0.0
    %352 = vmatprep.subr.mxu0 0.0
    %353 = vmatpush1.msra.mxu0 0.0
    %354 = vmatprep.subr.mxu0 0.0
    %355 = vmatpush1.msra.mxu0 0.0
    %356 = vmatprep.subr.mxu0 0.0
    %357 = vmatpush1.msra.mxu0 0.0
    %358 = vmatprep.subr.mxu0 0.0
    %359 = vmatpush1.msra.mxu0 0.0
    %360 = vmatprep.subr.mxu0 0.0
    %361 = vmatpush1.msra.mxu0 0.0
    %362 = vmatprep.subr.mxu0 0.0
    %363 = vmatpush1.msra.mxu0 0.0
    %364 = vmatprep.subr.mxu0 0.0
    %365 = vmatpush1.msra.mxu0 %v33
    %366 = vmatprep.subr.mxu0 0.0
    %367 = vmatpush1.msra.mxu0 %v32
    %368 = vmatprep.subr.mxu0 0.0
    %369 = vmatpush1.msra.mxu0 %v31
    %370 = vmatprep.subr.mxu0 0.0
    %371 = vmatpush1.msra.mxu0 %v30
    %372 = vmatprep.subr.mxu0 0.0
    %373 = vmatpush2.msra.mxu0 0.0
    %374 = vmatprep.subr.mxu0 0.0
    %375 = vmatpush2.msra.mxu0 0.0
    %376 = vmatprep.subr.mxu0 0.0
    %377 = vmatpush2.msra.mxu0 0.0
    %378 = vmatprep.subr.mxu0 0.0
    %379 = vmatpush2.msra.mxu0 0.0
    %380 = vmatprep.subr.mxu0 0.0
    %381 = vmatpush2.msra.mxu0 0.0
    %382 = vmatprep.subr.mxu0 0.0
    %383 = vmatpush2.msra.mxu0 0.0
    %384 = vmatprep.subr.mxu0 0.0
    %385 = vmatpush2.msra.mxu0 0.0
    %386 = vmatprep.subr.mxu0 0.0
    %387 = vmatpush2.msra.mxu0 0.0
    %388 = vmatprep.subr.mxu0 0.0
    %389 = vmatpush2.msra.mxu0 0.0
    %390 = vmatprep.subr.mxu0 0.0
    %391 = vmatpush2.msra.mxu0 0.0
    %392 = vmatprep.subr.mxu0 0.0
    %393 = vmatpush2.msra.mxu0 0.0
    %394 = vmatprep.subr.mxu0 0.0
    %395 = vmatpush2.msra.mxu0 0.0
    %396 = vmatprep.subr.mxu0 0.0
    %397 = vmatpush2.msra.mxu0 0.0
    %398 = vmatprep.subr.mxu0 0.0
    %399 = vmatpush2.msra.mxu0 0.0
    %400 = vmatprep.subr.mxu0 0.0
    %401 = vmatpush2.msra.mxu0 0.0
    %402 = vmatprep.subr.mxu0 0.0
    %403 = vmatpush2.msra.mxu0 0.0
    %404 = vmatprep.mubr.f32.mxu0 0.0
    %405 = vmatmul.mubr.f32.gmra.mxu0 %v338
    %v406 = vpop.f32.mrf.mxu0
    %v407 = vadd.f32 0.0, %v406
    %v408 = vpop.f32.mrf.mxu0
    %409 = vdwg.mxu0
    %v411 = vrot.slane %v407, 4
    %v413 = vadd.f32 %v119, %v411
    %v414 = vxor.u32 %v413, 2147483648
    %v415 = vmul.f32 %v414, 1.442695
    %v416 = vpow.pop %v415
    %v417 = vadd.f32 %v416, 1.0
    %v418 = vrcp.pop %v417
    %v419 = vmul.f32 1.0, %v418
    %v420 = vmul.f32 %v419, 2.0
    %v421 = vsub.f32 %v420, 1.0
    %v423 = vrot.slane %v327, 6
    %v425 = vmul.f32 %v419, %v423
    %427 = vrot.lane.b32.xlu0 %v421, 64
    %v428 = vpop.permute.xlu0 %427
    %v430 = vmul.f32 %v419, %v428
    %432 = vrot.lane.b32.xlu0 %v430, 32
    %v433 = vpop.permute.xlu0 %432
    %v435 = vadd.f32 %v425, %v433
    %v436 = vtanh.pop %v435
    %438 = vrot.lane.b32.xlu0 %v436, 64
    %v439 = vpop.permute.xlu0 %438
    %v441 = vmul.f32 %v419, %v439
    %v443 = vrot.slane %v441, 4
    %444 = vrot.lane.b32.xlu0 %v443, 32
    %v445 = vpop.permute.xlu0 %444
    %v446 = vsel %vm127, %v445, 0
    %448 = vmatprep.subr.mxu0 0.0
    %449 = vmatpush1.msra.mxu0 0.0
    %450 = vmatprep.subr.mxu0 0.0
    %451 = vmatpush1.msra.mxu0 0.0
    %452 = vmatprep.subr.mxu0 0.0
    %453 = vmatpush1.msra.mxu0 0.0
    %454 = vmatprep.subr.mxu0 0.0
    %455 = vmatpush1.msra.mxu0 0.0
    %456 = vmatprep.subr.mxu0 0.0
    %457 = vmatpush1.msra.mxu0 0.0
    %458 = vmatprep.subr.mxu0 0.0
    %459 = vmatpush1.msra.mxu0 0.0
    %460 = vmatprep.subr.mxu0 0.0
    %461 = vmatpush1.msra.mxu0 0.0
    %462 = vmatprep.subr.mxu0 0.0
    %463 = vmatpush1.msra.mxu0 0.0
    %464 = vmatprep.subr.mxu0 0.0
    %465 = vmatpush1.msra.mxu0 0.0
    %466 = vmatprep.subr.mxu0 0.0
    %467 = vmatpush1.msra.mxu0 0.0
    %468 = vmatprep.subr.mxu0 0.0
    %469 = vmatpush1.msra.mxu0 0.0
    %470 = vmatprep.subr.mxu0 0.0
    %471 = vmatpush1.msra.mxu0 0.0
    %472 = vmatprep.subr.mxu0 0.0
    %473 = vmatpush1.msra.mxu0 %v33
    %474 = vmatprep.subr.mxu0 0.0
    %475 = vmatpush1.msra.mxu0 %v32
    %476 = vmatprep.subr.mxu0 0.0
    %477 = vmatpush1.msra.mxu0 %v31
    %478 = vmatprep.subr.mxu0 0.0
    %479 = vmatpush1.msra.mxu0 %v30
    %480 = vmatprep.subr.mxu0 0.0
    %481 = vmatpush2.msra.mxu0 0.0
    %482 = vmatprep.subr.mxu0 0.0
    %483 = vmatpush2.msra.mxu0 0.0
    %484 = vmatprep.subr.mxu0 0.0
    %485 = vmatpush2.msra.mxu0 0.0
    %486 = vmatprep.subr.mxu0 0.0
    %487 = vmatpush2.msra.mxu0 0.0
    %488 = vmatprep.subr.mxu0 0.0
    %489 = vmatpush2.msra.mxu0 0.0
    %490 = vmatprep.subr.mxu0 0.0
    %491 = vmatpush2.msra.mxu0 0.0
    %492 = vmatprep.subr.mxu0 0.0
    %493 = vmatpush2.msra.mxu0 0.0
    %494 = vmatprep.subr.mxu0 0.0
    %495 = vmatpush2.msra.mxu0 0.0
    %496 = vmatprep.subr.mxu0 0.0
    %497 = vmatpush2.msra.mxu0 0.0
    %498 = vmatprep.subr.mxu0 0.0
    %499 = vmatpush2.msra.mxu0 0.0
    %500 = vmatprep.subr.mxu0 0.0
    %501 = vmatpush2.msra.mxu0 0.0
    %502 = vmatprep.subr.mxu0 0.0
    %503 = vmatpush2.msra.mxu0 0.0
    %504 = vmatprep.subr.mxu0 0.0
    %505 = vmatpush2.msra.mxu0 0.0
    %506 = vmatprep.subr.mxu0 0.0
    %507 = vmatpush2.msra.mxu0 0.0
    %508 = vmatprep.subr.mxu0 0.0
    %509 = vmatpush2.msra.mxu0 0.0
    %510 = vmatprep.subr.mxu0 0.0
    %511 = vmatpush2.msra.mxu0 0.0
    %512 = vmatprep.mubr.f32.mxu0 0.0
    %513 = vmatmul.mubr.f32.gmra.mxu0 %v446
    %v514 = vpop.f32.mrf.mxu0
    %v515 = vadd.f32 0.0, %v514
    %v516 = vpop.f32.mrf.mxu0
    %517 = vdwg.mxu0
    %v519 = vrot.slane %v515, 2
    %v521 = vadd.f32 %v119, %v519
    %v522 = vxor.u32 %v521, 2147483648
    %v523 = vmul.f32 %v522, 1.442695
    %v524 = vpow.pop %v523
    %v525 = vadd.f32 %v524, 1.0
    %v526 = vrcp.pop %v525
    %v527 = vmul.f32 1.0, %v526
    %v528 = vmul.f32 %v527, 2.0
    %v529 = vsub.f32 %v528, 1.0
    %v531 = vrot.slane %v435, 6
    %v533 = vmul.f32 %v527, %v531
    %535 = vrot.lane.b32.xlu0 %v529, 64
    %v536 = vpop.permute.xlu0 %535
    %v538 = vmul.f32 %v527, %v536
    %540 = vrot.lane.b32.xlu0 %v538, 32
    %v541 = vpop.permute.xlu0 %540
    %v543 = vadd.f32 %v533, %v541
    %v544 = vtanh.pop %v543
    %546 = vrot.lane.b32.xlu0 %v544, 64
    %v547 = vpop.permute.xlu0 %546
    %v549 = vmul.f32 %v527, %v547
    %v551 = vrot.slane %v549, 6
    %552 = vrot.lane.b32.xlu0 %v551, 32
    %v553 = vpop.permute.xlu0 %552
    %v554 = vsel %vm127, %v553, 0
    %556 = vmatprep.subr.mxu0 0.0
    %557 = vmatpush1.msra.mxu0 0.0
    %558 = vmatprep.subr.mxu0 0.0
    %559 = vmatpush1.msra.mxu0 0.0
    %560 = vmatprep.subr.mxu0 0.0
    %561 = vmatpush1.msra.mxu0 0.0
    %562 = vmatprep.subr.mxu0 0.0
    %563 = vmatpush1.msra.mxu0 0.0
    %564 = vmatprep.subr.mxu0 0.0
    %565 = vmatpush1.msra.mxu0 0.0
    %566 = vmatprep.subr.mxu0 0.0
    %567 = vmatpush1.msra.mxu0 0.0
    %568 = vmatprep.subr.mxu0 0.0
    %569 = vmatpush1.msra.mxu0 0.0
    %570 = vmatprep.subr.mxu0 0.0
    %571 = vmatpush1.msra.mxu0 0.0
    %572 = vmatprep.subr.mxu0 0.0
    %573 = vmatpush1.msra.mxu0 0.0
    %574 = vmatprep.subr.mxu0 0.0
    %575 = vmatpush1.msra.mxu0 0.0
    %576 = vmatprep.subr.mxu0 0.0
    %577 = vmatpush1.msra.mxu0 0.0
    %578 = vmatprep.subr.mxu0 0.0
    %579 = vmatpush1.msra.mxu0 0.0
    %580 = vmatprep.subr.mxu0 0.0
    %581 = vmatpush1.msra.mxu0 %v33
    %582 = vmatprep.subr.mxu0 0.0
    %583 = vmatpush1.msra.mxu0 %v32
    %584 = vmatprep.subr.mxu0 0.0
    %585 = vmatpush1.msra.mxu0 %v31
    %586 = vmatprep.subr.mxu0 0.0
    %587 = vmatpush1.msra.mxu0 %v30
    %588 = vmatprep.subr.mxu0 0.0
    %589 = vmatpush2.msra.mxu0 0.0
    %590 = vmatprep.subr.mxu0 0.0
    %591 = vmatpush2.msra.mxu0 0.0
    %592 = vmatprep.subr.mxu0 0.0
    %593 = vmatpush2.msra.mxu0 0.0
    %594 = vmatprep.subr.mxu0 0.0
    %595 = vmatpush2.msra.mxu0 0.0
    %596 = vmatprep.subr.mxu0 0.0
    %597 = vmatpush2.msra.mxu0 0.0
    %598 = vmatprep.subr.mxu0 0.0
    %599 = vmatpush2.msra.mxu0 0.0
    %600 = vmatprep.subr.mxu0 0.0
    %601 = vmatpush2.msra.mxu0 0.0
    %602 = vmatprep.subr.mxu0 0.0
    %603 = vmatpush2.msra.mxu0 0.0
    %604 = vmatprep.subr.mxu0 0.0
    %605 = vmatpush2.msra.mxu0 0.0
    %606 = vmatprep.subr.mxu0 0.0
    %607 = vmatpush2.msra.mxu0 0.0
    %608 = vmatprep.subr.mxu0 0.0
    %609 = vmatpush2.msra.mxu0 0.0
    %610 = vmatprep.subr.mxu0 0.0
    %611 = vmatpush2.msra.mxu0 0.0
    %612 = vmatprep.subr.mxu0 0.0
    %613 = vmatpush2.msra.mxu0 0.0
    %614 = vmatprep.subr.mxu0 0.0
    %615 = vmatpush2.msra.mxu0 0.0
    %616 = vmatprep.subr.mxu0 0.0
    %617 = vmatpush2.msra.mxu0 0.0
    %618 = vmatprep.subr.mxu0 0.0
    %619 = vmatpush2.msra.mxu0 0.0
    %620 = vmatprep.mubr.f32.mxu0 0.0
    %621 = vmatmul.mubr.f32.gmra.mxu0 %v554
    %v622 = vpop.f32.mrf.mxu0
    %v623 = vadd.f32 0.0, %v622
    %v624 = vpop.f32.mrf.mxu0
    %625 = vdwg.mxu0
    %v626 = vadd.f32 %v124, %v623
    %v627 = vxor.u32 %v626, 2147483648
    %v628 = vmul.f32 %v627, 1.442695
    %v629 = vpow.pop %v628
    %v630 = vadd.f32 %v629, 1.0
    %v631 = vrcp.pop %v630
    %v632 = vmul.f32 1.0, %v631
    %v633 = vmul.f32 %v632, 2.0
    %v634 = vsub.f32 %v633, 1.0
    %v636 = vrot.slane %v543, 6
    %v638 = vmul.f32 %v632, %v636
    %640 = vrot.lane.b32.xlu0 %v634, 64
    %v641 = vpop.permute.xlu0 %640
    %v643 = vmul.f32 %v632, %v641
    %645 = vrot.lane.b32.xlu0 %v643, 32
    %v646 = vpop.permute.xlu0 %645
    %v648 = vadd.f32 %v638, %v646
    %v649 = vtanh.pop %v648
    %651 = vrot.lane.b32.xlu0 %v649, 64
    %v652 = vpop.permute.xlu0 %651
    %v654 = vmul.f32 %v632, %v652
    %656 = vrot.lane.b32.xlu0 %v654, 32
    %v657 = vpop.permute.xlu0 %656
    %v658 = vsel %vm127, %v657, 0
    %660 = vmatprep.subr.mxu0 0.0
    %661 = vmatpush1.msra.mxu0 0.0
    %662 = vmatprep.subr.mxu0 0.0
    %663 = vmatpush1.msra.mxu0 0.0
    %664 = vmatprep.subr.mxu0 0.0
    %665 = vmatpush1.msra.mxu0 0.0
    %666 = vmatprep.subr.mxu0 0.0
    %667 = vmatpush1.msra.mxu0 0.0
    %668 = vmatprep.subr.mxu0 0.0
    %669 = vmatpush1.msra.mxu0 0.0
    %670 = vmatprep.subr.mxu0 0.0
    %671 = vmatpush1.msra.mxu0 0.0
    %672 = vmatprep.subr.mxu0 0.0
    %673 = vmatpush1.msra.mxu0 0.0
    %674 = vmatprep.subr.mxu0 0.0
    %675 = vmatpush1.msra.mxu0 0.0
    %676 = vmatprep.subr.mxu0 0.0
    %677 = vmatpush1.msra.mxu0 0.0
    %678 = vmatprep.subr.mxu0 0.0
    %679 = vmatpush1.msra.mxu0 0.0
    %680 = vmatprep.subr.mxu0 0.0
    %681 = vmatpush1.msra.mxu0 0.0
    %682 = vmatprep.subr.mxu0 0.0
    %683 = vmatpush1.msra.mxu0 0.0
    %684 = vmatprep.subr.mxu0 0.0
    %685 = vmatpush1.msra.mxu0 %v33
    %686 = vmatprep.subr.mxu0 0.0
    %687 = vmatpush1.msra.mxu0 %v32
    %688 = vmatprep.subr.mxu0 0.0
    %689 = vmatpush1.msra.mxu0 %v31
    %690 = vmatprep.subr.mxu0 0.0
    %691 = vmatpush1.msra.mxu0 %v30
    %692 = vmatprep.subr.mxu0 0.0
    %693 = vmatpush2.msra.mxu0 0.0
    %694 = vmatprep.subr.mxu0 0.0
    %695 = vmatpush2.msra.mxu0 0.0
    %696 = vmatprep.subr.mxu0 0.0
    %697 = vmatpush2.msra.mxu0 0.0
    %698 = vmatprep.subr.mxu0 0.0
    %699 = vmatpush2.msra.mxu0 0.0
    %700 = vmatprep.subr.mxu0 0.0
    %701 = vmatpush2.msra.mxu0 0.0
    %702 = vmatprep.subr.mxu0 0.0
    %703 = vmatpush2.msra.mxu0 0.0
    %704 = vmatprep.subr.mxu0 0.0
    %705 = vmatpush2.msra.mxu0 0.0
    %706 = vmatprep.subr.mxu0 0.0
    %707 = vmatpush2.msra.mxu0 0.0
    %708 = vmatprep.subr.mxu0 0.0
    %709 = vmatpush2.msra.mxu0 0.0
    %710 = vmatprep.subr.mxu0 0.0
    %711 = vmatpush2.msra.mxu0 0.0
    %712 = vmatprep.subr.mxu0 0.0
    %713 = vmatpush2.msra.mxu0 0.0
    %714 = vmatprep.subr.mxu0 0.0
    %715 = vmatpush2.msra.mxu0 0.0
    %716 = vmatprep.subr.mxu0 0.0
    %717 = vmatpush2.msra.mxu0 0.0
    %718 = vmatprep.subr.mxu0 0.0
    %719 = vmatpush2.msra.mxu0 0.0
    %720 = vmatprep.subr.mxu0 0.0
    %721 = vmatpush2.msra.mxu0 0.0
    %722 = vmatprep.subr.mxu0 0.0
    %723 = vmatpush2.msra.mxu0 0.0
    %724 = vmatprep.mubr.f32.mxu0 0.0
    %725 = vmatmul.mubr.f32.gmra.mxu0 %v658
    %v726 = vpop.f32.mrf.mxu0
    %v727 = vadd.f32 0.0, %v726
    %v728 = vpop.f32.mrf.mxu0
    %729 = vdwg.mxu0
    %v731 = vrot.slane %v727, 6
    %v733 = vadd.f32 %v124, %v731
    %v734 = vxor.u32 %v733, 2147483648
    %v735 = vmul.f32 %v734, 1.442695
    %v736 = vpow.pop %v735
    %v737 = vadd.f32 %v736, 1.0
    %v738 = vrcp.pop %v737
    %v739 = vmul.f32 1.0, %v738
    %v740 = vmul.f32 %v739, 2.0
    %v741 = vsub.f32 %v740, 1.0
    %v743 = vrot.slane %v648, 6
    %v745 = vmul.f32 %v739, %v743
    %747 = vrot.lane.b32.xlu0 %v741, 64
    %v748 = vpop.permute.xlu0 %747
    %v750 = vmul.f32 %v739, %v748
    %752 = vrot.lane.b32.xlu0 %v750, 32
    %v753 = vpop.permute.xlu0 %752
    %v755 = vadd.f32 %v745, %v753
    %v756 = vtanh.pop %v755
    %758 = vrot.lane.b32.xlu0 %v756, 64
    %v759 = vpop.permute.xlu0 %758
    %v761 = vmul.f32 %v739, %v759
    %v763 = vrot.slane %v761, 2
    %764 = vrot.lane.b32.xlu0 %v763, 32
    %v765 = vpop.permute.xlu0 %764
    %v766 = vsel %vm127, %v765, 0
    %768 = vmatprep.subr.mxu0 0.0
    %769 = vmatpush1.msra.mxu0 0.0
    %770 = vmatprep.subr.mxu0 0.0
    %771 = vmatpush1.msra.mxu0 0.0
    %772 = vmatprep.subr.mxu0 0.0
    %773 = vmatpush1.msra.mxu0 0.0
    %774 = vmatprep.subr.mxu0 0.0
    %775 = vmatpush1.msra.mxu0 0.0
    %776 = vmatprep.subr.mxu0 0.0
    %777 = vmatpush1.msra.mxu0 0.0
    %778 = vmatprep.subr.mxu0 0.0
    %779 = vmatpush1.msra.mxu0 0.0
    %780 = vmatprep.subr.mxu0 0.0
    %781 = vmatpush1.msra.mxu0 0.0
    %782 = vmatprep.subr.mxu0 0.0
    %783 = vmatpush1.msra.mxu0 0.0
    %784 = vmatprep.subr.mxu0 0.0
    %785 = vmatpush1.msra.mxu0 0.0
    %786 = vmatprep.subr.mxu0 0.0
    %787 = vmatpush1.msra.mxu0 0.0
    %788 = vmatprep.subr.mxu0 0.0
    %789 = vmatpush1.msra.mxu0 0.0
    %790 = vmatprep.subr.mxu0 0.0
    %791 = vmatpush1.msra.mxu0 0.0
    %792 = vmatprep.subr.mxu0 0.0
    %793 = vmatpush1.msra.mxu0 %v33
    %794 = vmatprep.subr.mxu0 0.0
    %795 = vmatpush1.msra.mxu0 %v32
    %796 = vmatprep.subr.mxu0 0.0
    %797 = vmatpush1.msra.mxu0 %v31
    %798 = vmatprep.subr.mxu0 0.0
    %799 = vmatpush1.msra.mxu0 %v30
    %800 = vmatprep.subr.mxu0 0.0
    %801 = vmatpush2.msra.mxu0 0.0
    %802 = vmatprep.subr.mxu0 0.0
    %803 = vmatpush2.msra.mxu0 0.0
    %804 = vmatprep.subr.mxu0 0.0
    %805 = vmatpush2.msra.mxu0 0.0
    %806 = vmatprep.subr.mxu0 0.0
    %807 = vmatpush2.msra.mxu0 0.0
    %808 = vmatprep.subr.mxu0 0.0
    %809 = vmatpush2.msra.mxu0 0.0
    %810 = vmatprep.subr.mxu0 0.0
    %811 = vmatpush2.msra.mxu0 0.0
    %812 = vmatprep.subr.mxu0 0.0
    %813 = vmatpush2.msra.mxu0 0.0
    %814 = vmatprep.subr.mxu0 0.0
    %815 = vmatpush2.msra.mxu0 0.0
    %816 = vmatprep.subr.mxu0 0.0
    %817 = vmatpush2.msra.mxu0 0.0
    %818 = vmatprep.subr.mxu0 0.0
    %819 = vmatpush2.msra.mxu0 0.0
    %820 = vmatprep.subr.mxu0 0.0
    %821 = vmatpush2.msra.mxu0 0.0
    %822 = vmatprep.subr.mxu0 0.0
    %823 = vmatpush2.msra.mxu0 0.0
    %824 = vmatprep.subr.mxu0 0.0
    %825 = vmatpush2.msra.mxu0 0.0
    %826 = vmatprep.subr.mxu0 0.0
    %827 = vmatpush2.msra.mxu0 0.0
    %828 = vmatprep.subr.mxu0 0.0
    %829 = vmatpush2.msra.mxu0 0.0
    %830 = vmatprep.subr.mxu0 0.0
    %831 = vmatpush2.msra.mxu0 0.0
    %832 = vmatprep.mubr.f32.mxu0 0.0
    %833 = vmatmul.mubr.f32.gmra.mxu0 %v766
    %v834 = vpop.f32.mrf.mxu0
    %v835 = vadd.f32 0.0, %v834
    %v836 = vpop.f32.mrf.mxu0
    %837 = vdwg.mxu0
    %v839 = vrot.slane %v835, 4
    %v841 = vadd.f32 %v124, %v839
    %v842 = vxor.u32 %v841, 2147483648
    %v843 = vmul.f32 %v842, 1.442695
    %v844 = vpow.pop %v843
    %v845 = vadd.f32 %v844, 1.0
    %v846 = vrcp.pop %v845
    %v847 = vmul.f32 1.0, %v846
    %v848 = vmul.f32 %v847, 2.0
    %v849 = vsub.f32 %v848, 1.0
    %v851 = vrot.slane %v755, 6
    %v853 = vmul.f32 %v847, %v851
    %855 = vrot.lane.b32.xlu0 %v849, 64
    %v856 = vpop.permute.xlu0 %855
    %v858 = vmul.f32 %v847, %v856
    %860 = vrot.lane.b32.xlu0 %v858, 32
    %v861 = vpop.permute.xlu0 %860
    %v863 = vadd.f32 %v853, %v861
    %v864 = vtanh.pop %v863
    %866 = vrot.lane.b32.xlu0 %v864, 64
    %v867 = vpop.permute.xlu0 %866
    %v869 = vmul.f32 %v847, %v867
    %v871 = vrot.slane %v869, 4
    %872 = vrot.lane.b32.xlu0 %v871, 32
    %v873 = vpop.permute.xlu0 %872
    %v874 = vsel %vm127, %v873, 0
    %876 = vmatprep.subr.mxu0 0.0
    %877 = vmatpush1.msra.mxu0 0.0
    %878 = vmatprep.subr.mxu0 0.0
    %879 = vmatpush1.msra.mxu0 0.0
    %880 = vmatprep.subr.mxu0 0.0
    %881 = vmatpush1.msra.mxu0 0.0
    %882 = vmatprep.subr.mxu0 0.0
    %883 = vmatpush1.msra.mxu0 0.0
    %884 = vmatprep.subr.mxu0 0.0
    %885 = vmatpush1.msra.mxu0 0.0
    %886 = vmatprep.subr.mxu0 0.0
    %887 = vmatpush1.msra.mxu0 0.0
    %888 = vmatprep.subr.mxu0 0.0
    %889 = vmatpush1.msra.mxu0 0.0
    %890 = vmatprep.subr.mxu0 0.0
    %891 = vmatpush1.msra.mxu0 0.0
    %892 = vmatprep.subr.mxu0 0.0
    %893 = vmatpush1.msra.mxu0 0.0
    %894 = vmatprep.subr.mxu0 0.0
    %895 = vmatpush1.msra.mxu0 0.0
    %896 = vmatprep.subr.mxu0 0.0
    %897 = vmatpush1.msra.mxu0 0.0
    %898 = vmatprep.subr.mxu0 0.0
    %899 = vmatpush1.msra.mxu0 0.0
    %900 = vmatprep.subr.mxu0 0.0
    %901 = vmatpush1.msra.mxu0 %v33
    %902 = vmatprep.subr.mxu0 0.0
    %903 = vmatpush1.msra.mxu0 %v32
    %904 = vmatprep.subr.mxu0 0.0
    %905 = vmatpush1.msra.mxu0 %v31
    %906 = vmatprep.subr.mxu0 0.0
    %907 = vmatpush1.msra.mxu0 %v30
    %908 = vmatprep.subr.mxu0 0.0
    %909 = vmatpush2.msra.mxu0 0.0
    %910 = vmatprep.subr.mxu0 0.0
    %911 = vmatpush2.msra.mxu0 0.0
    %912 = vmatprep.subr.mxu0 0.0
    %913 = vmatpush2.msra.mxu0 0.0
    %914 = vmatprep.subr.mxu0 0.0
    %915 = vmatpush2.msra.mxu0 0.0
    %916 = vmatprep.subr.mxu0 0.0
    %917 = vmatpush2.msra.mxu0 0.0
    %918 = vmatprep.subr.mxu0 0.0
    %919 = vmatpush2.msra.mxu0 0.0
    %920 = vmatprep.subr.mxu0 0.0
    %921 = vmatpush2.msra.mxu0 0.0
    %922 = vmatprep.subr.mxu0 0.0
    %923 = vmatpush2.msra.mxu0 0.0
    %924 = vmatprep.subr.mxu0 0.0
    %925 = vmatpush2.msra.mxu0 0.0
    %926 = vmatprep.subr.mxu0 0.0
    %927 = vmatpush2.msra.mxu0 0.0
    %928 = vmatprep.subr.mxu0 0.0
    %929 = vmatpush2.msra.mxu0 0.0
    %930 = vmatprep.subr.mxu0 0.0
    %931 = vmatpush2.msra.mxu0 0.0
    %932 = vmatprep.subr.mxu0 0.0
    %933 = vmatpush2.msra.mxu0 0.0
    %934 = vmatprep.subr.mxu0 0.0
    %935 = vmatpush2.msra.mxu0 0.0
    %936 = vmatprep.subr.mxu0 0.0
    %937 = vmatpush2.msra.mxu0 0.0
    %938 = vmatprep.subr.mxu0 0.0
    %939 = vmatpush2.msra.mxu0 0.0
    %940 = vmatprep.mubr.f32.mxu0 0.0
    %941 = vmatmul.mubr.f32.gmra.mxu0 %v874
    %v942 = vpop.f32.mrf.mxu0
    %v943 = vadd.f32 0.0, %v942
    %v944 = vpop.f32.mrf.mxu0
    %945 = vdwg.mxu0
    %v947 = vrot.slane %v943, 2
    %v949 = vadd.f32 %v124, %v947
    %v950 = vxor.u32 %v949, 2147483648
    %v951 = vmul.f32 %v950, 1.442695
    %v952 = vpow.pop %v951
    %v953 = vadd.f32 %v952, 1.0
    %v954 = vrcp.pop %v953
    %v955 = vmul.f32 1.0, %v954
    %v956 = vmul.f32 %v955, 2.0
    %v957 = vsub.f32 %v956, 1.0
    %v959 = vrot.slane %v863, 6
    %v961 = vmul.f32 %v955, %v959
    %963 = vrot.lane.b32.xlu0 %v957, 64
    %v964 = vpop.permute.xlu0 %963
    %v966 = vmul.f32 %v955, %v964
    %968 = vrot.lane.b32.xlu0 %v966, 32
    %v969 = vpop.permute.xlu0 %968
    %v971 = vadd.f32 %v961, %v969
    %v972 = vtanh.pop %v971
    %974 = vrot.lane.b32.xlu0 %v972, 64
    %v975 = vpop.permute.xlu0 %974
    %v977 = vmul.f32 %v955, %v975
    %v978 = vld [vmem:[%s4] sm:$0xff]
    %v979 = vld [vmem:[%s4 + $0x8] sm:$0xff]
    %v980 = vld [vmem:[%s4 + $0x10] sm:$0xff]
    %v981 = vld [vmem:[%s4 + $0x18] sm:$0xff]
    %v982 = vld [vmem:[%s5] sm:$0x1]
    %v984 = vlaneseq
    %v985 = vshrl.u32 %v984, 7
    %v986 = vsub.s32 0, %v985
    %v987 = vrot.slane %v982, %v986
    %v990 = vrot.slane %v977, 6
    %991 = vrot.lane.b32.xlu0 %v990, 32
    %v992 = vpop.permute.xlu0 %991
    %v993 = vsel %vm127, %v992, 0
    %995 = vmatprep.subr.mxu0 0.0
    %996 = vmatpush1.msra.mxu0 0.0
    %997 = vmatprep.subr.mxu0 0.0
    %998 = vmatpush1.msra.mxu0 0.0
    %999 = vmatprep.subr.mxu0 0.0
    %1000 = vmatpush1.msra.mxu0 0.0
    %1001 = vmatprep.subr.mxu0 0.0
    %1002 = vmatpush1.msra.mxu0 0.0
    %1003 = vmatprep.subr.mxu0 0.0
    %1004 = vmatpush1.msra.mxu0 0.0
    %1005 = vmatprep.subr.mxu0 0.0
    %1006 = vmatpush1.msra.mxu0 0.0
    %1007 = vmatprep.subr.mxu0 0.0
    %1008 = vmatpush1.msra.mxu0 0.0
    %1009 = vmatprep.subr.mxu0 0.0
    %1010 = vmatpush1.msra.mxu0 0.0
    %1011 = vmatprep.subr.mxu0 0.0
    %1012 = vmatpush1.msra.mxu0 0.0
    %1013 = vmatprep.subr.mxu0 0.0
    %1014 = vmatpush1.msra.mxu0 0.0
    %1015 = vmatprep.subr.mxu0 0.0
    %1016 = vmatpush1.msra.mxu0 0.0
    %1017 = vmatprep.subr.mxu0 0.0
    %1018 = vmatpush1.msra.mxu0 0.0
    %1019 = vmatprep.subr.mxu0 0.0
    %1020 = vmatpush1.msra.mxu0 %v981
    %1021 = vmatprep.subr.mxu0 0.0
    %1022 = vmatpush1.msra.mxu0 %v980
    %1023 = vmatprep.subr.mxu0 0.0
    %1024 = vmatpush1.msra.mxu0 %v979
    %1025 = vmatprep.subr.mxu0 0.0
    %1026 = vmatpush1.msra.mxu0 %v978
    %1027 = vmatprep.subr.mxu0 0.0
    %1028 = vmatpush2.msra.mxu0 0.0
    %1029 = vmatprep.subr.mxu0 0.0
    %1030 = vmatpush2.msra.mxu0 0.0
    %1031 = vmatprep.subr.mxu0 0.0
    %1032 = vmatpush2.msra.mxu0 0.0
    %1033 = vmatprep.subr.mxu0 0.0
    %1034 = vmatpush2.msra.mxu0 0.0
    %1035 = vmatprep.subr.mxu0 0.0
    %1036 = vmatpush2.msra.mxu0 0.0
    %1037 = vmatprep.subr.mxu0 0.0
    %1038 = vmatpush2.msra.mxu0 0.0
    %1039 = vmatprep.subr.mxu0 0.0
    %1040 = vmatpush2.msra.mxu0 0.0
    %1041 = vmatprep.subr.mxu0 0.0
    %1042 = vmatpush2.msra.mxu0 0.0
    %1043 = vmatprep.subr.mxu0 0.0
    %1044 = vmatpush2.msra.mxu0 0.0
    %1045 = vmatprep.subr.mxu0 0.0
    %1046 = vmatpush2.msra.mxu0 0.0
    %1047 = vmatprep.subr.mxu0 0.0
    %1048 = vmatpush2.msra.mxu0 0.0
    %1049 = vmatprep.subr.mxu0 0.0
    %1050 = vmatpush2.msra.mxu0 0.0
    %1051 = vmatprep.subr.mxu0 0.0
    %1052 = vmatpush2.msra.mxu0 0.0
    %1053 = vmatprep.subr.mxu0 0.0
    %1054 = vmatpush2.msra.mxu0 0.0
    %1055 = vmatprep.subr.mxu0 0.0
    %1056 = vmatpush2.msra.mxu0 0.0
    %1057 = vmatprep.subr.mxu0 0.0
    %1058 = vmatpush2.msra.mxu0 0.0
    %1059 = vmatprep.mubr.f32.mxu0 0.0
    %1060 = vmatmul.mubr.f32.gmra.mxu0 %v993
    %v1061 = vpop.f32.mrf.mxu0
    %v1062 = vadd.f32 %v987, %v1061
    %v1063 = vpop.f32.mrf.mxu0
    %1064 = vdwg.mxu0
    %v1065 = vmax.f32 %v1062, 0.0
    %v1066 = vld [vmem:[%s6] sm:$0xff]
    %v1067 = vld [vmem:[%s6 + $0x8] sm:$0xff]
    %v1068 = vld [vmem:[%s6 + $0x10] sm:$0xff]
    %v1069 = vld [vmem:[%s6 + $0x18] sm:$0xff]
    %v1070 = vld [vmem:[%s6 + $0x20] sm:$0xff]
    %v1071 = vld [vmem:[%s6 + $0x28] sm:$0xff]
    %v1072 = vld [vmem:[%s6 + $0x30] sm:$0xff]
    %v1073 = vld [vmem:[%s6 + $0x38] sm:$0xff]
    %v1074 = vld [vmem:[%s6 + $0x40] sm:$0xff]
    %v1075 = vld [vmem:[%s6 + $0x48] sm:$0xff]
    %v1076 = vld [vmem:[%s6 + $0x50] sm:$0xff]
    %v1077 = vld [vmem:[%s6 + $0x58] sm:$0xff]
    %v1078 = vld [vmem:[%s6 + $0x60] sm:$0xff]
    %v1079 = vld [vmem:[%s6 + $0x68] sm:$0xff]
    %v1080 = vld [vmem:[%s6 + $0x70] sm:$0xff]
    %v1081 = vld [vmem:[%s6 + $0x78] sm:$0xff]
    %v1082 = vld [vmem:[%s7] sm:$0x1]
    %v1084 = vlaneseq
    %v1085 = vshrl.u32 %v1084, 7
    %v1086 = vsub.s32 0, %v1085
    %v1087 = vrot.slane %v1082, %v1086
    %1089 = vmatprep.subr.mxu0 0.0
    %1090 = vmatpush1.msra.mxu0 %v1081
    %1091 = vmatprep.subr.mxu0 0.0
    %1092 = vmatpush1.msra.mxu0 %v1080
    %1093 = vmatprep.subr.mxu0 0.0
    %1094 = vmatpush1.msra.mxu0 %v1079
    %1095 = vmatprep.subr.mxu0 0.0
    %1096 = vmatpush1.msra.mxu0 %v1078
    %1097 = vmatprep.subr.mxu0 0.0
    %1098 = vmatpush1.msra.mxu0 %v1077
    %1099 = vmatprep.subr.mxu0 0.0
    %1100 = vmatpush1.msra.mxu0 %v1076
    %1101 = vmatprep.subr.mxu0 0.0
    %1102 = vmatpush1.msra.mxu0 %v1075
    %1103 = vmatprep.subr.mxu0 0.0
    %1104 = vmatpush1.msra.mxu0 %v1074
    %1105 = vmatprep.subr.mxu0 0.0
    %1106 = vmatpush1.msra.mxu0 %v1073
    %1107 = vmatprep.subr.mxu0 0.0
    %1108 = vmatpush1.msra.mxu0 %v1072
    %1109 = vmatprep.subr.mxu0 0.0
    %1110 = vmatpush1.msra.mxu0 %v1071
    %1111 = vmatprep.subr.mxu0 0.0
    %1112 = vmatpush1.msra.mxu0 %v1070
    %1113 = vmatprep.subr.mxu0 0.0
    %1114 = vmatpush1.msra.mxu0 %v1069
    %1115 = vmatprep.subr.mxu0 0.0
    %1116 = vmatpush1.msra.mxu0 %v1068
    %1117 = vmatprep.subr.mxu0 0.0
    %1118 = vmatpush1.msra.mxu0 %v1067
    %1119 = vmatprep.subr.mxu0 0.0
    %1120 = vmatpush1.msra.mxu0 %v1066
    %1121 = vmatprep.subr.mxu0 0.0
    %1122 = vmatpush2.msra.mxu0 0.0
    %1123 = vmatprep.subr.mxu0 0.0
    %1124 = vmatpush2.msra.mxu0 0.0
    %1125 = vmatprep.subr.mxu0 0.0
    %1126 = vmatpush2.msra.mxu0 0.0
    %1127 = vmatprep.subr.mxu0 0.0
    %1128 = vmatpush2.msra.mxu0 0.0
    %1129 = vmatprep.subr.mxu0 0.0
    %1130 = vmatpush2.msra.mxu0 0.0
    %1131 = vmatprep.subr.mxu0 0.0
    %1132 = vmatpush2.msra.mxu0 0.0
    %1133 = vmatprep.subr.mxu0 0.0
    %1134 = vmatpush2.msra.mxu0 0.0
    %1135 = vmatprep.subr.mxu0 0.0
    %1136 = vmatpush2.msra.mxu0 0.0
    %1137 = vmatprep.subr.mxu0 0.0
    %1138 = vmatpush2.msra.mxu0 0.0
    %1139 = vmatprep.subr.mxu0 0.0
    %1140 = vmatpush2.msra.mxu0 0.0
    %1141 = vmatprep.subr.mxu0 0.0
    %1142 = vmatpush2.msra.mxu0 0.0
    %1143 = vmatprep.subr.mxu0 0.0
    %1144 = vmatpush2.msra.mxu0 0.0
    %1145 = vmatprep.subr.mxu0 0.0
    %1146 = vmatpush2.msra.mxu0 0.0
    %1147 = vmatprep.subr.mxu0 0.0
    %1148 = vmatpush2.msra.mxu0 0.0
    %1149 = vmatprep.subr.mxu0 0.0
    %1150 = vmatpush2.msra.mxu0 0.0
    %1151 = vmatprep.subr.mxu0 0.0
    %1152 = vmatpush2.msra.mxu0 0.0
    %1153 = vmatprep.mubr.f32.mxu0 0.0
    %1154 = vmatmul.mubr.f32.gmra.mxu0 %v1065
    %v1155 = vpop.f32.mrf.mxu0
    %v1156 = vadd.f32 %v1087, %v1155
    %v1157 = vpop.f32.mrf.mxu0
    %1158 = vdwg.mxu0
    %vm1159 = vcmask 58368
    %v1160 = vsel %vm1159, %v1156, -inf
    %1161 = vmax.xlane.f32.xlu0 %v1160
    %v1162 = vpop.xlane.xlu0 %1161
    %v1163 = vsub.f32 %v1156, %v1162
    %v1164 = vmul.f32 %v1163, 1.442695
    %v1165 = vpow.pop %v1164
    %v1166 = vsel %vm1159, %v1165, 0.0
    %1167 = vadd.xlane.f32.xlu0 %v1166
    %v1168 = vpop.xlane.xlu0 %1167
    %v1169 = vrcp.pop %v1168
    %v1170 = vmul.f32 %v1165, %v1169
    %1171 = vst.msk [vmem:[#allocation2] sm:$0x3] %vm1159, %v1170
    %vm1172 = vcmask 123968
    %v1173 = vsel %vm1172, %v1156, -inf
    %1174 = vmax.xlane.f32.xlu0 %v1173
    %v1175 = vpop.xlane.xlu0 %1174
    %v1176 = vsub.f32 %v1156, %v1175
    %v1177 = vmul.f32 %v1176, 1.442695
    %v1178 = vpow.pop %v1177
    %1180 = vrot.lane.b32.xlu0 %v1178, 120
    %v1181 = vpop.permute.xlu0 %1180
    %v1183 = vsel %vm1159, %v1181, 0.0
    %1184 = vadd.xlane.f32.xlu0 %v1183
    %v1185 = vpop.xlane.xlu0 %1184
    %v1186 = vrcp.pop %v1185
    %v1187 = vmul.f32 %v1178, %v1186
    %1188 = vst.msk [vmem:[#allocation2] sm:$0x3] %vm1172, %v1187
    %vm1189 = vcmask 189568
    %v1190 = vsel %vm1189, %v1156, -inf
    %1191 = vmax.xlane.f32.xlu0 %v1190
    %v1192 = vpop.xlane.xlu0 %1191
    %v1193 = vsub.f32 %v1156, %v1192
    %v1194 = vmul.f32 %v1193, 1.442695
    %v1195 = vpow.pop %v1194
    %1197 = vrot.lane.b32.xlu0 %v1195, 112
    %v1198 = vpop.permute.xlu0 %1197
    %v1200 = vsel %vm1159, %v1198, 0.0
    %1201 = vadd.xlane.f32.xlu0 %v1200
    %v1202 = vpop.xlane.xlu0 %1201
    %v1203 = vrcp.pop %v1202
    %v1204 = vmul.f32 %v1195, %v1203
    %1205 = vst.msk [vmem:[#allocation2] sm:$0x3] %vm1189, %v1204
    // Predicated region
    $region34: #{tpu_custom_call.1} parent=1 // pred_check
      _
    $region35: #{tpu_custom_call.1} parent=1 // pred_check_branch
      %1207 = sbr.rel (0) target = $region37
    $region36: #{tpu_custom_call.1} parent=1 // pred_region
      %s1209 = ssub.s32 32, 32
      %1210 = vsyncadd [#allocation3], %s1209
      %s1212 = sshll.u32 [#allocation2], 4
      %s1213 = int_to_ptr.vmem [resolvable:$true] %s1212
      %1215 = dma.vmem_to_hbm [thread:$0]  %s1213, 32, %s8, [#allocation3]
    $region37: #{tpu_custom_call.1} parent=1 // pred_fallthru
      _
    // Predicated region
    $region38: #{tpu_custom_call.1} parent=1 // pred_check
      _
    $region39: #{tpu_custom_call.1} parent=1 // pred_check_branch
      %1217 = sbr.rel (0) target = $region41
    $region40: #{tpu_custom_call.1} parent=1 // pred_region
      %1218 = dma.done [#allocation3], 32
    $region41: #{tpu_custom_call.1} parent=1 // pred_fallthru
      _
    %1219 = vsyncpa [#allocation3], 1

</llo_original>
